<compile_context>
chip_gen: v6e
topology: v6e:2x2x1
jax: 0.10.0
libtpu: 0.0.40
codegen_flags: <defaults>
</compile_context>

<pallas_src>
import functools

import jax
import jax.numpy as jnp
from jax.experimental import pallas as pl
from jax.experimental.pallas import tpu as pltpu


def _double_conv_kernel(x_ref, w1_ref, b1_ref, w2_ref, b2_ref, o_ref,
                        mpad_ref, col1_ref, col2_ref, *, H, W, nb):
    # x_ref:    (NB, Cin, (H+3)*(W+2))  bf16   fully zero-padded images, rows flattened
    # w1_ref:   (Cmid, 9*Cin)           bf16   stage-1 weights (BN scale folded in)
    # b1_ref:   (Cmid, 1)               f32    stage-1 folded bias
    # w2_ref:   (Cout, 9*Cmid)          bf16   stage-2 weights (BN scale folded in)
    # b2_ref:   (Cout, 1)               f32    stage-2 folded bias
    # o_ref:    (NB, Cout, H*(W+2))     f32    anchor-layout output (wrap cols stripped later)
    # mpad_ref: (Cmid, (H+3)*(W+2))     bf16   zero-padded stage-1 activation (stage-2 input)
    # col1_ref: (9*Cin,  H*(W+2))       f32    im2col slab, rows ordered (tap, channel)
    # col2_ref: (9*Cmid, H*(W+2))       f32
    cin = x_ref.shape[1]
    cmid = w1_ref.shape[0]
    wp = W + 2
    S = H * wp                     # anchor columns per image (incl. 2 wrap cols per row)
    lpad = mpad_ref.shape[1]

    # Zero only the border spans of the stage-2 padded buffer (top row + first left
    # border, and the trailing bottom-row/slack span).  The interior [wp+1, wp+1+S)
    # is fully overwritten by the constant-shift hand-off store for every image.
    # Unconditional (no program_id gating) -> correct on v7x megacore.
    mpad_ref[:, 0:wp + 1] = jnp.zeros((cmid, wp + 1), jnp.bfloat16)
    mpad_ref[:, (H + 1) * wp + 1:] = jnp.zeros((cmid, lpad - (H + 1) * wp - 1), jnp.bfloat16)

    # Wrap-column mask, hoisted out of the per-image loop: lane j within each wp-wide
    # anchor row is valid iff j < W.
    lane = jax.lax.broadcasted_iota(jnp.int32, (cmid, S), 1)
    keep = (lane % wp) < W

    w1 = w1_ref[...]
    b1 = b1_ref[...]
    w2 = w2_ref[...]
    b2 = b2_ref[...]

    for b in range(nb):
        # ---- stage 1: im2col straight from the pre-padded input (no in-kernel padding).
        # Each tap is a single contiguous offset slice of the flat padded image.
        for t in range(9):
            off = (t // 3) * wp + (t % 3)
            col1_ref[t * cin:(t + 1) * cin, :] = (
                x_ref[b, :, off:off + S].astype(jnp.float32))

        # One big-K bf16 matmul on the MXU (K = 9*Cin), f32 accumulate; fused bias+ReLU.
        acc1 = jnp.dot(w1, col1_ref[...].astype(jnp.bfloat16),
                       preferred_element_type=jnp.float32)
        y1 = jnp.maximum(acc1 + b1, 0.0)                       # (Cmid, S) f32

        # ---- hand-off: single constant-shift masked store (dst - src == wp+1 == W+3).
        # The masked-out wrap columns land exactly on the interior left/right zero
        # borders of the stage-2 padded image, so no extra zeroing is needed.
        mpad_ref[:, wp + 1:wp + 1 + S] = (
            jnp.where(keep, y1, 0.0).astype(jnp.bfloat16))

        # ---- stage 2: identical structure (K = 9*Cmid).
        for t in range(9):
            off = (t // 3) * wp + (t % 3)
            col2_ref[t * cmid:(t + 1) * cmid, :] = (
                mpad_ref[:, off:off + S].astype(jnp.float32))

        acc2 = jnp.dot(w2, col2_ref[...].astype(jnp.bfloat16),
                       preferred_element_type=jnp.float32)

        # Lane-dense anchor-layout store; wrap columns are stripped in the wrapper.
        o_ref[b, :, :] = jnp.maximum(acc2 + b2, 0.0)


def _fold_bn(conv_bias, gamma, beta, running_mean, running_var, eps=1e-5):
    scale = gamma / jnp.sqrt(running_var + eps)
    bias = beta + (conv_bias - running_mean) * scale
    return scale, bias


def _fold_conv_bn(w_oihw, conv_bias, gamma, beta, mean, var, eps=1e-5):
    """Fold eval-mode BatchNorm into the conv.

    Returns bf16 (Cout, 9*Cin) matmul weights whose columns are ordered tap-major
    (t = kh*3 + kw), channel-minor -- matching the kernel's im2col slab -- and a
    f32 (Cout, 1) bias.
    """
    cout, cin = w_oihw.shape[0], w_oihw.shape[1]
    scale, bias = _fold_bn(conv_bias, gamma, beta, mean, var, eps)
    w_mat = jnp.transpose(w_oihw, (0, 2, 3, 1)).reshape(cout, 9 * cin)  # OIHW -> O(HWI)
    w_mat = (w_mat * scale[:, None]).astype(jnp.bfloat16)
    return w_mat, bias.reshape(cout, 1).astype(jnp.float32)


def _pick_batch_block(n, target=8):
    """Largest divisor of n that is <= target (images processed per grid step)."""
    nb = 1
    for d in range(1, min(n, target) + 1):
        if n % d == 0:
            nb = d
    return nb


def double_conv_forward(x_nchw, p, batch_block=None):
    """Forward pass of DoubleConv. Input/output in PyTorch NCHW layout (f32)."""
    N, Cin, H, W = x_nchw.shape
    Cmid = p["w1"].shape[0]
    Cout = p["w2"].shape[0]
    Wp = W + 2
    S = H * Wp                     # anchor columns per image (2 wrap cols per row)
    LPAD = (H + 3) * Wp            # flat padded image length (>= (H+2)*Wp + 2 tap slack)

    NB = batch_block if batch_block is not None else _pick_batch_block(N)
    assert N % NB == 0
    G = N // NB

    w1, b1 = _fold_conv_bn(p["w1"], p["b1"], p["g1"], p["be1"], p["rm1"], p["rv1"])
    w2, b2 = _fold_conv_bn(p["w2"], p["b2"], p["g2"], p["be2"], p["rm2"], p["rv2"])

    # Fully zero-pad (1 top, 2 bottom, 1 left, 1 right) in the wrapper and flatten the
    # rows: the kernel's 3x3 taps become plain contiguous offset slices of this block.
    # bf16 halves the input HBM/DMA traffic; extra padded traffic is ~ (H+3)(W+2)/(HW).
    x_pad = jnp.pad(x_nchw, ((0, 0), (0, 0), (1, 2), (1, 1)))
    x_pad = x_pad.reshape(N, Cin, LPAD).astype(jnp.bfloat16)

    kernel = functools.partial(_double_conv_kernel, H=H, W=W, nb=NB)
    out = pl.pallas_call(
        kernel,
        out_shape=jax.ShapeDtypeStruct((N, Cout, S), jnp.float32),
        grid_spec=pltpu.PrefetchScalarGridSpec(
            num_scalar_prefetch=0,
            grid=(G,),
            in_specs=[
                pl.BlockSpec((NB, Cin, LPAD), lambda g: (g, 0, 0)),
                pl.BlockSpec((Cmid, 9 * Cin), lambda g: (0, 0)),
                pl.BlockSpec((Cmid, 1), lambda g: (0, 0)),
                pl.BlockSpec((Cout, 9 * Cmid), lambda g: (0, 0)),
                pl.BlockSpec((Cout, 1), lambda g: (0, 0)),
            ],
            out_specs=pl.BlockSpec((NB, Cout, S), lambda g: (g, 0, 0)),
            scratch_shapes=[
                pltpu.VMEM((Cmid, LPAD), jnp.bfloat16),      # padded stage-1 activation
                pltpu.VMEM((9 * Cin, S), jnp.float32),        # im2col slab, stage 1
                pltpu.VMEM((9 * Cmid, S), jnp.float32),       # im2col slab, stage 2
            ],
        ),
        compiler_params=pltpu.CompilerParams(
            dimension_semantics=("parallel",),
            vmem_limit_bytes=32 * 1024 * 1024),   # explicit budget; tiny usage here
    )(x_pad, w1, b1, w2, b2)

    # Anchor layout -> NCHW: drop the 2 wrap columns of every row in the wrapper.
    return out.reshape(N, Cout, H, Wp)[..., :W]


def init_double_conv_params(key, in_channels, out_channels):
    """Deterministic synthetic parameters matching nn.Conv2d / nn.BatchNorm2d shapes."""
    ks = jax.random.split(key, 8)
    p = {}
    # Conv2d(in, out, 3, padding=1): weight OIHW, bias (out,)
    p["w1"] = 0.1 * jax.random.normal(ks[0], (out_channels, in_channels, 3, 3), jnp.float32)
    p["b1"] = 0.1 * jax.random.normal(ks[1], (out_channels,), jnp.float32)
    # BatchNorm2d(out): gamma, beta, running_mean, running_var
    p["g1"] = 1.0 + 0.1 * jax.random.normal(ks[2], (out_channels,), jnp.float32)
    p["be1"] = 0.1 * jax.random.normal(ks[3], (out_channels,), jnp.float32)
    p["rm1"] = jnp.zeros((out_channels,), jnp.float32)
    p["rv1"] = jnp.ones((out_channels,), jnp.float32)
    # Second conv/BN (out -> out)
    p["w2"] = 0.1 * jax.random.normal(ks[4], (out_channels, out_channels, 3, 3), jnp.float32)
    p["b2"] = 0.1 * jax.random.normal(ks[5], (out_channels,), jnp.float32)
    p["g2"] = 1.0 + 0.1 * jax.random.normal(ks[6], (out_channels,), jnp.float32)
    p["be2"] = 0.1 * jax.random.normal(ks[7], (out_channels,), jnp.float32)
    p["rm2"] = jnp.zeros((out_channels,), jnp.float32)
    p["rv2"] = jnp.ones((out_channels,), jnp.float32)
    return p


def _reference_double_conv(x_nchw, p):
    """Pure-JAX f32 reference (lax conv) for correctness checking."""
    x = jnp.transpose(x_nchw, (0, 2, 3, 1))

    def stage(x, w_oihw, b, g, be, rm, rv):
        w = jnp.transpose(w_oihw, (2, 3, 1, 0))
        y = jax.lax.conv_general_dilated(
            x, w, window_strides=(1, 1), padding="SAME",
            dimension_numbers=("NHWC", "HWIO", "NHWC"))
        s, bb = _fold_bn(b, g, be, rm, rv)
        return jnp.maximum(y * s.reshape(1, 1, 1, -1) + bb.reshape(1, 1, 1, -1), 0.0)

    x = stage(x, p["w1"], p["b1"], p["g1"], p["be1"], p["rm1"], p["rv1"])
    x = stage(x, p["w2"], p["b2"], p["g2"], p["be2"], p["rm2"], p["rv2"])
    return jnp.transpose(x, (0, 3, 1, 2))


if __name__ == "__main__":
    key = jax.random.PRNGKey(0)
    k_x, k_p = jax.random.split(key)

    N, Cin, Cout, H, W = 2, 4, 8, 16, 16
    x = jax.random.normal(k_x, (N, Cin, H, W), jnp.float32)  # PyTorch-style NCHW
    params = init_double_conv_params(k_p, Cin, Cout)

    out = double_conv_forward(x, params)
    out = jax.block_until_ready(out)

    ref = jax.block_until_ready(_reference_double_conv(x, params))
    assert out.shape == (N, Cout, H, W)
    # bf16 MXU operands with f32 accumulation -> loosened tolerance vs the f32 reference.
    max_err = float(jnp.max(jnp.abs(out - ref)))
    assert jnp.allclose(out, ref, atol=5e-2, rtol=5e-2), max_err

    print("KERNEL_OK")
</pallas_src>

<mosaic_0001>
module attributes {stable_mosaic.version = 11 : i64} {
  func.func @_double_conv_kernel(%arg0: i32, %arg1: memref<2x4x342xbf16, #tpu.memory_space<vmem>>, %arg2: memref<8x36xbf16, #tpu.memory_space<vmem>>, %arg3: memref<8x1xf32, #tpu.memory_space<vmem>>, %arg4: memref<8x72xbf16, #tpu.memory_space<vmem>>, %arg5: memref<8x1xf32, #tpu.memory_space<vmem>>, %arg6: memref<2x8x288xf32, #tpu.memory_space<vmem>>, %arg7: memref<8x342xbf16, #tpu.memory_space<vmem>>, %arg8: memref<36x288xf32, #tpu.memory_space<vmem>>, %arg9: memref<72x288xf32, #tpu.memory_space<vmem>>) attributes {dimension_semantics = [#tpu.dimension_semantics<parallel>], iteration_bounds = array<i64: 1>, scalar_prefetch = 0 : i64, scratch_operands = 3 : i64, tpu.core_type = #tpu.core_type<tc>, window_params = [{transform_indices = @transform_0, window_bounds = array<i64: 2, 4, 342>}, {pipeline_mode = #tpu.pipeline_mode<synchronous>, transform_indices = @transform_1, window_bounds = array<i64: 8, 36>}, {pipeline_mode = #tpu.pipeline_mode<synchronous>, transform_indices = @transform_2, window_bounds = array<i64: 8, 1>}, {pipeline_mode = #tpu.pipeline_mode<synchronous>, transform_indices = @transform_3, window_bounds = array<i64: 8, 72>}, {pipeline_mode = #tpu.pipeline_mode<synchronous>, transform_indices = @transform_4, window_bounds = array<i64: 8, 1>}, {transform_indices = @transform_5, window_bounds = array<i64: 2, 8, 288>}]} {
    %cst = arith.constant 0.000000e+00 : bf16
    %0 = vector.broadcast %cst : bf16 to vector<8x19xbf16>
    %c0 = arith.constant 0 : index
    %c0_0 = arith.constant 0 : index
    %1 = vector.load %arg7[%c0, %c0_0] : memref<8x342xbf16, #tpu.memory_space<vmem>>, vector<8x19xbf16>
    tpu.vector_store %arg7[%c0, %c0_0], %0 {strides = array<i32>} : memref<8x342xbf16, #tpu.memory_space<vmem>>, vector<8x19xbf16>,
    %cst_1 = arith.constant 0.000000e+00 : bf16
    %2 = vector.broadcast %cst_1 : bf16 to vector<8x35xbf16>
    %c0_2 = arith.constant 0 : index
    %c307 = arith.constant 307 : index
    %3 = vector.load %arg7[%c0_2, %c307] : memref<8x342xbf16, #tpu.memory_space<vmem>>, vector<8x35xbf16>
    tpu.vector_store %arg7[%c0_2, %c307], %2 {strides = array<i32>} : memref<8x342xbf16, #tpu.memory_space<vmem>>, vector<8x35xbf16>,
    %4 = tpu.iota {dimensions = array<i32: 1>} : vector<8x288xi32>
    %c18_i32 = arith.constant 18 : i32
    %c0_i32 = arith.constant 0 : i32
    %5 = arith.cmpi eq, %c18_i32, %c0_i32 : i32
    %c1_i32 = arith.constant 1 : i32
    %6 = arith.select %5, %c1_i32, %c18_i32 : i32
    %7 = vector.broadcast %6 : i32 to vector<8x288xi32>
    %8 = arith.remsi %4, %7 : vector<8x288xi32>
    %c0_i32_3 = arith.constant 0 : i32
    %9 = vector.broadcast %c0_i32_3 : i32 to vector<8x288xi32>
    %10 = arith.cmpi ne, %8, %9 : vector<8x288xi32>
    %c0_i32_4 = arith.constant 0 : i32
    %11 = vector.broadcast %c0_i32_4 : i32 to vector<8x288xi32>
    %12 = arith.cmpi slt, %8, %11 : vector<8x288xi32>
    %c0_i32_5 = arith.constant 0 : i32
    %13 = arith.cmpi slt, %6, %c0_i32_5 : i32
    %14 = vector.broadcast %13 : i1 to vector<8x288xi1>
    %15 = vector.broadcast %14 : vector<8x288xi1> to vector<8x288xi1>
    %16 = arith.xori %12, %15 : vector<8x288xi1>
    %17 = arith.andi %16, %10 : vector<8x288xi1>
    %18 = vector.broadcast %6 : i32 to vector<8x288xi32>
    %19 = arith.addi %8, %18 : vector<8x288xi32>
    %20 = arith.select %17, %19, %8 : vector<8x288xi1>, vector<8x288xi32>
    %c16_i32 = arith.constant 16 : i32
    %21 = vector.broadcast %c16_i32 : i32 to vector<8x288xi32>
    %22 = arith.cmpi slt, %20, %21 : vector<8x288xi32>
    %c0_6 = arith.constant 0 : index
    %c0_7 = arith.constant 0 : index
    %23 = vector.load %arg2[%c0_6, %c0_7] : memref<8x36xbf16, #tpu.memory_space<vmem>>, vector<8x36xbf16>
    %c0_8 = arith.constant 0 : index
    %c0_9 = arith.constant 0 : index
    %24 = vector.load %arg3[%c0_8, %c0_9] : memref<8x1xf32, #tpu.memory_space<vmem>>, vector<8x1xf32>
    %c0_10 = arith.constant 0 : index
    %c0_11 = arith.constant 0 : index
    %25 = vector.load %arg4[%c0_10, %c0_11] : memref<8x72xbf16, #tpu.memory_space<vmem>>, vector<8x72xbf16>
    %c0_12 = arith.constant 0 : index
    %c0_13 = arith.constant 0 : index
    %26 = vector.load %arg5[%c0_12, %c0_13] : memref<8x1xf32, #tpu.memory_space<vmem>>, vector<8x1xf32>
    %c0_14 = arith.constant 0 : index
    %c0_15 = arith.constant 0 : index
    %c0_16 = arith.constant 0 : index
    %27 = vector.load %arg1[%c0_14, %c0_15, %c0_16] : memref<2x4x342xbf16, #tpu.memory_space<vmem>>, vector<1x4x288xbf16>
    %28 = vector.shape_cast %27 : vector<1x4x288xbf16> to vector<4x288xbf16>
    %29 = arith.extf %28 : vector<4x288xbf16> to vector<4x288xf32>
    %c0_17 = arith.constant 0 : index
    %c0_18 = arith.constant 0 : index
    %30 = vector.load %arg8[%c0_17, %c0_18] : memref<36x288xf32, #tpu.memory_space<vmem>>, vector<4x288xf32>
    tpu.vector_store %arg8[%c0_17, %c0_18], %29 {strides = array<i32>} : memref<36x288xf32, #tpu.memory_space<vmem>>, vector<4x288xf32>,
    %c0_19 = arith.constant 0 : index
    %c0_20 = arith.constant 0 : index
    %c1 = arith.constant 1 : index
    %31 = vector.load %arg1[%c0_19, %c0_20, %c1] : memref<2x4x342xbf16, #tpu.memory_space<vmem>>, vector<1x4x288xbf16>
    %32 = vector.shape_cast %31 : vector<1x4x288xbf16> to vector<4x288xbf16>
    %33 = arith.extf %32 : vector<4x288xbf16> to vector<4x288xf32>
    %c4 = arith.constant 4 : index
    %c0_21 = arith.constant 0 : index
    %34 = vector.load %arg8[%c4, %c0_21] : memref<36x288xf32, #tpu.memory_space<vmem>>, vector<4x288xf32>
    tpu.vector_store %arg8[%c4, %c0_21], %33 {strides = array<i32>} : memref<36x288xf32, #tpu.memory_space<vmem>>, vector<4x288xf32>,
    %c0_22 = arith.constant 0 : index
    %c0_23 = arith.constant 0 : index
    %c2 = arith.constant 2 : index
    %35 = vector.load %arg1[%c0_22, %c0_23, %c2] : memref<2x4x342xbf16, #tpu.memory_space<vmem>>, vector<1x4x288xbf16>
    %36 = vector.shape_cast %35 : vector<1x4x288xbf16> to vector<4x288xbf16>
    %37 = arith.extf %36 : vector<4x288xbf16> to vector<4x288xf32>
    %c8 = arith.constant 8 : index
    %c0_24 = arith.constant 0 : index
    %38 = vector.load %arg8[%c8, %c0_24] : memref<36x288xf32, #tpu.memory_space<vmem>>, vector<4x288xf32>
    tpu.vector_store %arg8[%c8, %c0_24], %37 {strides = array<i32>} : memref<36x288xf32, #tpu.memory_space<vmem>>, vector<4x288xf32>,
    %c0_25 = arith.constant 0 : index
    %c0_26 = arith.constant 0 : index
    %c18 = arith.constant 18 : index
    %39 = vector.load %arg1[%c0_25, %c0_26, %c18] : memref<2x4x342xbf16, #tpu.memory_space<vmem>>, vector<1x4x288xbf16>
    %40 = vector.shape_cast %39 : vector<1x4x288xbf16> to vector<4x288xbf16>
    %41 = arith.extf %40 : vector<4x288xbf16> to vector<4x288xf32>
    %c12 = arith.constant 12 : index
    %c0_27 = arith.constant 0 : index
    %42 = vector.load %arg8[%c12, %c0_27] : memref<36x288xf32, #tpu.memory_space<vmem>>, vector<4x288xf32>
    tpu.vector_store %arg8[%c12, %c0_27], %41 {strides = array<i32>} : memref<36x288xf32, #tpu.memory_space<vmem>>, vector<4x288xf32>,
    %c0_28 = arith.constant 0 : index
    %c0_29 = arith.constant 0 : index
    %c19 = arith.constant 19 : index
    %43 = vector.load %arg1[%c0_28, %c0_29, %c19] : memref<2x4x342xbf16, #tpu.memory_space<vmem>>, vector<1x4x288xbf16>
    %44 = vector.shape_cast %43 : vector<1x4x288xbf16> to vector<4x288xbf16>
    %45 = arith.extf %44 : vector<4x288xbf16> to vector<4x288xf32>
    %c16 = arith.constant 16 : index
    %c0_30 = arith.constant 0 : index
    %46 = vector.load %arg8[%c16, %c0_30] : memref<36x288xf32, #tpu.memory_space<vmem>>, vector<4x288xf32>
    tpu.vector_store %arg8[%c16, %c0_30], %45 {strides = array<i32>} : memref<36x288xf32, #tpu.memory_space<vmem>>, vector<4x288xf32>,
    %c0_31 = arith.constant 0 : index
    %c0_32 = arith.constant 0 : index
    %c20 = arith.constant 20 : index
    %47 = vector.load %arg1[%c0_31, %c0_32, %c20] : memref<2x4x342xbf16, #tpu.memory_space<vmem>>, vector<1x4x288xbf16>
    %48 = vector.shape_cast %47 : vector<1x4x288xbf16> to vector<4x288xbf16>
    %49 = arith.extf %48 : vector<4x288xbf16> to vector<4x288xf32>
    %c20_33 = arith.constant 20 : index
    %c0_34 = arith.constant 0 : index
    %50 = vector.load %arg8[%c20_33, %c0_34] : memref<36x288xf32, #tpu.memory_space<vmem>>, vector<4x288xf32>
    tpu.vector_store %arg8[%c20_33, %c0_34], %49 {strides = array<i32>} : memref<36x288xf32, #tpu.memory_space<vmem>>, vector<4x288xf32>,
    %c0_35 = arith.constant 0 : index
    %c0_36 = arith.constant 0 : index
    %c36 = arith.constant 36 : index
    %51 = vector.load %arg1[%c0_35, %c0_36, %c36] : memref<2x4x342xbf16, #tpu.memory_space<vmem>>, vector<1x4x288xbf16>
    %52 = vector.shape_cast %51 : vector<1x4x288xbf16> to vector<4x288xbf16>
    %53 = arith.extf %52 : vector<4x288xbf16> to vector<4x288xf32>
    %c24 = arith.constant 24 : index
    %c0_37 = arith.constant 0 : index
    %54 = vector.load %arg8[%c24, %c0_37] : memref<36x288xf32, #tpu.memory_space<vmem>>, vector<4x288xf32>
    tpu.vector_store %arg8[%c24, %c0_37], %53 {strides = array<i32>} : memref<36x288xf32, #tpu.memory_space<vmem>>, vector<4x288xf32>,
    %c0_38 = arith.constant 0 : index
    %c0_39 = arith.constant 0 : index
    %c37 = arith.constant 37 : index
    %55 = vector.load %arg1[%c0_38, %c0_39, %c37] : memref<2x4x342xbf16, #tpu.memory_space<vmem>>, vector<1x4x288xbf16>
    %56 = vector.shape_cast %55 : vector<1x4x288xbf16> to vector<4x288xbf16>
    %57 = arith.extf %56 : vector<4x288xbf16> to vector<4x288xf32>
    %c28 = arith.constant 28 : index
    %c0_40 = arith.constant 0 : index
    %58 = vector.load %arg8[%c28, %c0_40] : memref<36x288xf32, #tpu.memory_space<vmem>>, vector<4x288xf32>
    tpu.vector_store %arg8[%c28, %c0_40], %57 {strides = array<i32>} : memref<36x288xf32, #tpu.memory_space<vmem>>, vector<4x288xf32>,
    %c0_41 = arith.constant 0 : index
    %c0_42 = arith.constant 0 : index
    %c38 = arith.constant 38 : index
    %59 = vector.load %arg1[%c0_41, %c0_42, %c38] : memref<2x4x342xbf16, #tpu.memory_space<vmem>>, vector<1x4x288xbf16>
    %60 = vector.shape_cast %59 : vector<1x4x288xbf16> to vector<4x288xbf16>
    %61 = arith.extf %60 : vector<4x288xbf16> to vector<4x288xf32>
    %c32 = arith.constant 32 : index
    %c0_43 = arith.constant 0 : index
    %62 = vector.load %arg8[%c32, %c0_43] : memref<36x288xf32, #tpu.memory_space<vmem>>, vector<4x288xf32>
    tpu.vector_store %arg8[%c32, %c0_43], %61 {strides = array<i32>} : memref<36x288xf32, #tpu.memory_space<vmem>>, vector<4x288xf32>,
    %c0_44 = arith.constant 0 : index
    %c0_45 = arith.constant 0 : index
    %63 = vector.load %arg8[%c0_44, %c0_45] : memref<36x288xf32, #tpu.memory_space<vmem>>, vector<36x288xf32>
    %64 = arith.truncf %63 : vector<36x288xf32> to vector<36x288xbf16>
    %cst_46 = arith.constant dense<0.000000e+00> : vector<8x288xf32>
    %65 = tpu.matmul %23, %64, %cst_46 {dimension_numbers = #tpu.dot_dimension_numbers<[1], [0], [0], [1], [0, 0, 1, 1], [], []>} : vector<8x36xbf16>, vector<36x288xbf16>, vector<8x288xf32> -> vector<8x288xf32>
    %66 = vector.broadcast %24 : vector<8x1xf32> to vector<8x288xf32>
    %67 = arith.addf %65, %66 : vector<8x288xf32>
    %cst_47 = arith.constant 0.000000e+00 : f32
    %68 = vector.broadcast %cst_47 : f32 to vector<8x288xf32>
    %69 = arith.maximumf %67, %68 : vector<8x288xf32>
    %cst_48 = arith.constant 0.000000e+00 : f32
    %70 = vector.broadcast %cst_48 : f32 to vector<8x288xf32>
    %71 = arith.select %22, %69, %70 : vector<8x288xi1>, vector<8x288xf32>
    %72 = arith.truncf %71 : vector<8x288xf32> to vector<8x288xbf16>
    %c0_49 = arith.constant 0 : index
    %c19_50 = arith.constant 19 : index
    %73 = vector.load %arg7[%c0_49, %c19_50] : memref<8x342xbf16, #tpu.memory_space<vmem>>, vector<8x288xbf16>
    tpu.vector_store %arg7[%c0_49, %c19_50], %72 {strides = array<i32>} : memref<8x342xbf16, #tpu.memory_space<vmem>>, vector<8x288xbf16>,
    %c0_51 = arith.constant 0 : index
    %c0_52 = arith.constant 0 : index
    %74 = vector.load %arg7[%c0_51, %c0_52] : memref<8x342xbf16, #tpu.memory_space<vmem>>, vector<8x288xbf16>
    %75 = arith.extf %74 : vector<8x288xbf16> to vector<8x288xf32>
    %c0_53 = arith.constant 0 : index
    %c0_54 = arith.constant 0 : index
    %76 = vector.load %arg9[%c0_53, %c0_54] : memref<72x288xf32, #tpu.memory_space<vmem>>, vector<8x288xf32>
    tpu.vector_store %arg9[%c0_53, %c0_54], %75 {strides = array<i32>} : memref<72x288xf32, #tpu.memory_space<vmem>>, vector<8x288xf32>,
    %c0_55 = arith.constant 0 : index
    %c1_56 = arith.constant 1 : index
    %77 = vector.load %arg7[%c0_55, %c1_56] : memref<8x342xbf16, #tpu.memory_space<vmem>>, vector<8x288xbf16>
    %78 = arith.extf %77 : vector<8x288xbf16> to vector<8x288xf32>
    %c8_57 = arith.constant 8 : index
    %c0_58 = arith.constant 0 : index
    %79 = vector.load %arg9[%c8_57, %c0_58] : memref<72x288xf32, #tpu.memory_space<vmem>>, vector<8x288xf32>
    tpu.vector_store %arg9[%c8_57, %c0_58], %78 {strides = array<i32>} : memref<72x288xf32, #tpu.memory_space<vmem>>, vector<8x288xf32>,
    %c0_59 = arith.constant 0 : index
    %c2_60 = arith.constant 2 : index
    %80 = vector.load %arg7[%c0_59, %c2_60] : memref<8x342xbf16, #tpu.memory_space<vmem>>, vector<8x288xbf16>
    %81 = arith.extf %80 : vector<8x288xbf16> to vector<8x288xf32>
    %c16_61 = arith.constant 16 : index
    %c0_62 = arith.constant 0 : index
    %82 = vector.load %arg9[%c16_61, %c0_62] : memref<72x288xf32, #tpu.memory_space<vmem>>, vector<8x288xf32>
    tpu.vector_store %arg9[%c16_61, %c0_62], %81 {strides = array<i32>} : memref<72x288xf32, #tpu.memory_space<vmem>>, vector<8x288xf32>,
    %c0_63 = arith.constant 0 : index
    %c18_64 = arith.constant 18 : index
    %83 = vector.load %arg7[%c0_63, %c18_64] : memref<8x342xbf16, #tpu.memory_space<vmem>>, vector<8x288xbf16>
    %84 = arith.extf %83 : vector<8x288xbf16> to vector<8x288xf32>
    %c24_65 = arith.constant 24 : index
    %c0_66 = arith.constant 0 : index
    %85 = vector.load %arg9[%c24_65, %c0_66] : memref<72x288xf32, #tpu.memory_space<vmem>>, vector<8x288xf32>
    tpu.vector_store %arg9[%c24_65, %c0_66], %84 {strides = array<i32>} : memref<72x288xf32, #tpu.memory_space<vmem>>, vector<8x288xf32>,
    %c0_67 = arith.constant 0 : index
    %c19_68 = arith.constant 19 : index
    %86 = vector.load %arg7[%c0_67, %c19_68] : memref<8x342xbf16, #tpu.memory_space<vmem>>, vector<8x288xbf16>
    %87 = arith.extf %86 : vector<8x288xbf16> to vector<8x288xf32>
    %c32_69 = arith.constant 32 : index
    %c0_70 = arith.constant 0 : index
    %88 = vector.load %arg9[%c32_69, %c0_70] : memref<72x288xf32, #tpu.memory_space<vmem>>, vector<8x288xf32>
    tpu.vector_store %arg9[%c32_69, %c0_70], %87 {strides = array<i32>} : memref<72x288xf32, #tpu.memory_space<vmem>>, vector<8x288xf32>,
    %c0_71 = arith.constant 0 : index
    %c20_72 = arith.constant 20 : index
    %89 = vector.load %arg7[%c0_71, %c20_72] : memref<8x342xbf16, #tpu.memory_space<vmem>>, vector<8x288xbf16>
    %90 = arith.extf %89 : vector<8x288xbf16> to vector<8x288xf32>
    %c40 = arith.constant 40 : index
    %c0_73 = arith.constant 0 : index
    %91 = vector.load %arg9[%c40, %c0_73] : memref<72x288xf32, #tpu.memory_space<vmem>>, vector<8x288xf32>
    tpu.vector_store %arg9[%c40, %c0_73], %90 {strides = array<i32>} : memref<72x288xf32, #tpu.memory_space<vmem>>, vector<8x288xf32>,
    %c0_74 = arith.constant 0 : index
    %c36_75 = arith.constant 36 : index
    %92 = vector.load %arg7[%c0_74, %c36_75] : memref<8x342xbf16, #tpu.memory_space<vmem>>, vector<8x288xbf16>
    %93 = arith.extf %92 : vector<8x288xbf16> to vector<8x288xf32>
    %c48 = arith.constant 48 : index
    %c0_76 = arith.constant 0 : index
    %94 = vector.load %arg9[%c48, %c0_76] : memref<72x288xf32, #tpu.memory_space<vmem>>, vector<8x288xf32>
    tpu.vector_store %arg9[%c48, %c0_76], %93 {strides = array<i32>} : memref<72x288xf32, #tpu.memory_space<vmem>>, vector<8x288xf32>,
    %c0_77 = arith.constant 0 : index
    %c37_78 = arith.constant 37 : index
    %95 = vector.load %arg7[%c0_77, %c37_78] : memref<8x342xbf16, #tpu.memory_space<vmem>>, vector<8x288xbf16>
    %96 = arith.extf %95 : vector<8x288xbf16> to vector<8x288xf32>
    %c56 = arith.constant 56 : index
    %c0_79 = arith.constant 0 : index
    %97 = vector.load %arg9[%c56, %c0_79] : memref<72x288xf32, #tpu.memory_space<vmem>>, vector<8x288xf32>
    tpu.vector_store %arg9[%c56, %c0_79], %96 {strides = array<i32>} : memref<72x288xf32, #tpu.memory_space<vmem>>, vector<8x288xf32>,
    %c0_80 = arith.constant 0 : index
    %c38_81 = arith.constant 38 : index
    %98 = vector.load %arg7[%c0_80, %c38_81] : memref<8x342xbf16, #tpu.memory_space<vmem>>, vector<8x288xbf16>
    %99 = arith.extf %98 : vector<8x288xbf16> to vector<8x288xf32>
    %c64 = arith.constant 64 : index
    %c0_82 = arith.constant 0 : index
    %100 = vector.load %arg9[%c64, %c0_82] : memref<72x288xf32, #tpu.memory_space<vmem>>, vector<8x288xf32>
    tpu.vector_store %arg9[%c64, %c0_82], %99 {strides = array<i32>} : memref<72x288xf32, #tpu.memory_space<vmem>>, vector<8x288xf32>,
    %c0_83 = arith.constant 0 : index
    %c0_84 = arith.constant 0 : index
    %101 = vector.load %arg9[%c0_83, %c0_84] : memref<72x288xf32, #tpu.memory_space<vmem>>, vector<72x288xf32>
    %102 = arith.truncf %101 : vector<72x288xf32> to vector<72x288xbf16>
    %cst_85 = arith.constant dense<0.000000e+00> : vector<8x288xf32>
    %103 = tpu.matmul %25, %102, %cst_85 {dimension_numbers = #tpu.dot_dimension_numbers<[1], [0], [0], [1], [0, 0, 1, 1], [], []>} : vector<8x72xbf16>, vector<72x288xbf16>, vector<8x288xf32> -> vector<8x288xf32>
    %104 = vector.broadcast %26 : vector<8x1xf32> to vector<8x288xf32>
    %105 = arith.addf %103, %104 : vector<8x288xf32>
    %cst_86 = arith.constant 0.000000e+00 : f32
    %106 = vector.broadcast %cst_86 : f32 to vector<8x288xf32>
    %107 = arith.maximumf %105, %106 : vector<8x288xf32>
    %c0_87 = arith.constant 0 : index
    %c0_88 = arith.constant 0 : index
    %c0_89 = arith.constant 0 : index
    %108 = vector.load %arg6[%c0_87, %c0_88, %c0_89] : memref<2x8x288xf32, #tpu.memory_space<vmem>>, vector<1x8x288xf32>
    %109 = vector.shape_cast %108 : vector<1x8x288xf32> to vector<8x288xf32>
    %110 = vector.shape_cast %107 : vector<8x288xf32> to vector<1x8x288xf32>
    tpu.vector_store %arg6[%c0_87, %c0_88, %c0_89], %110 {strides = array<i32>} : memref<2x8x288xf32, #tpu.memory_space<vmem>>, vector<1x8x288xf32>,
    %c1_90 = arith.constant 1 : index
    %c0_91 = arith.constant 0 : index
    %c0_92 = arith.constant 0 : index
    %111 = vector.load %arg1[%c1_90, %c0_91, %c0_92] : memref<2x4x342xbf16, #tpu.memory_space<vmem>>, vector<1x4x288xbf16>
    %112 = vector.shape_cast %111 : vector<1x4x288xbf16> to vector<4x288xbf16>
    %113 = arith.extf %112 : vector<4x288xbf16> to vector<4x288xf32>
    %c0_93 = arith.constant 0 : index
    %c0_94 = arith.constant 0 : index
    %114 = vector.load %arg8[%c0_93, %c0_94] : memref<36x288xf32, #tpu.memory_space<vmem>>, vector<4x288xf32>
    tpu.vector_store %arg8[%c0_93, %c0_94], %113 {strides = array<i32>} : memref<36x288xf32, #tpu.memory_space<vmem>>, vector<4x288xf32>,
    %c1_95 = arith.constant 1 : index
    %c0_96 = arith.constant 0 : index
    %c1_97 = arith.constant 1 : index
    %115 = vector.load %arg1[%c1_95, %c0_96, %c1_97] : memref<2x4x342xbf16, #tpu.memory_space<vmem>>, vector<1x4x288xbf16>
    %116 = vector.shape_cast %115 : vector<1x4x288xbf16> to vector<4x288xbf16>
    %117 = arith.extf %116 : vector<4x288xbf16> to vector<4x288xf32>
    %c4_98 = arith.constant 4 : index
    %c0_99 = arith.constant 0 : index
    %118 = vector.load %arg8[%c4_98, %c0_99] : memref<36x288xf32, #tpu.memory_space<vmem>>, vector<4x288xf32>
    tpu.vector_store %arg8[%c4_98, %c0_99], %117 {strides = array<i32>} : memref<36x288xf32, #tpu.memory_space<vmem>>, vector<4x288xf32>,
    %c1_100 = arith.constant 1 : index
    %c0_101 = arith.constant 0 : index
    %c2_102 = arith.constant 2 : index
    %119 = vector.load %arg1[%c1_100, %c0_101, %c2_102] : memref<2x4x342xbf16, #tpu.memory_space<vmem>>, vector<1x4x288xbf16>
    %120 = vector.shape_cast %119 : vector<1x4x288xbf16> to vector<4x288xbf16>
    %121 = arith.extf %120 : vector<4x288xbf16> to vector<4x288xf32>
    %c8_103 = arith.constant 8 : index
    %c0_104 = arith.constant 0 : index
    %122 = vector.load %arg8[%c8_103, %c0_104] : memref<36x288xf32, #tpu.memory_space<vmem>>, vector<4x288xf32>
    tpu.vector_store %arg8[%c8_103, %c0_104], %121 {strides = array<i32>} : memref<36x288xf32, #tpu.memory_space<vmem>>, vector<4x288xf32>,
    %c1_105 = arith.constant 1 : index
    %c0_106 = arith.constant 0 : index
    %c18_107 = arith.constant 18 : index
    %123 = vector.load %arg1[%c1_105, %c0_106, %c18_107] : memref<2x4x342xbf16, #tpu.memory_space<vmem>>, vector<1x4x288xbf16>
    %124 = vector.shape_cast %123 : vector<1x4x288xbf16> to vector<4x288xbf16>
    %125 = arith.extf %124 : vector<4x288xbf16> to vector<4x288xf32>
    %c12_108 = arith.constant 12 : index
    %c0_109 = arith.constant 0 : index
    %126 = vector.load %arg8[%c12_108, %c0_109] : memref<36x288xf32, #tpu.memory_space<vmem>>, vector<4x288xf32>
    tpu.vector_store %arg8[%c12_108, %c0_109], %125 {strides = array<i32>} : memref<36x288xf32, #tpu.memory_space<vmem>>, vector<4x288xf32>,
    %c1_110 = arith.constant 1 : index
    %c0_111 = arith.constant 0 : index
    %c19_112 = arith.constant 19 : index
    %127 = vector.load %arg1[%c1_110, %c0_111, %c19_112] : memref<2x4x342xbf16, #tpu.memory_space<vmem>>, vector<1x4x288xbf16>
    %128 = vector.shape_cast %127 : vector<1x4x288xbf16> to vector<4x288xbf16>
    %129 = arith.extf %128 : vector<4x288xbf16> to vector<4x288xf32>
    %c16_113 = arith.constant 16 : index
    %c0_114 = arith.constant 0 : index
    %130 = vector.load %arg8[%c16_113, %c0_114] : memref<36x288xf32, #tpu.memory_space<vmem>>, vector<4x288xf32>
    tpu.vector_store %arg8[%c16_113, %c0_114], %129 {strides = array<i32>} : memref<36x288xf32, #tpu.memory_space<vmem>>, vector<4x288xf32>,
    %c1_115 = arith.constant 1 : index
    %c0_116 = arith.constant 0 : index
    %c20_117 = arith.constant 20 : index
    %131 = vector.load %arg1[%c1_115, %c0_116, %c20_117] : memref<2x4x342xbf16, #tpu.memory_space<vmem>>, vector<1x4x288xbf16>
    %132 = vector.shape_cast %131 : vector<1x4x288xbf16> to vector<4x288xbf16>
    %133 = arith.extf %132 : vector<4x288xbf16> to vector<4x288xf32>
    %c20_118 = arith.constant 20 : index
    %c0_119 = arith.constant 0 : index
    %134 = vector.load %arg8[%c20_118, %c0_119] : memref<36x288xf32, #tpu.memory_space<vmem>>, vector<4x288xf32>
    tpu.vector_store %arg8[%c20_118, %c0_119], %133 {strides = array<i32>} : memref<36x288xf32, #tpu.memory_space<vmem>>, vector<4x288xf32>,
    %c1_120 = arith.constant 1 : index
    %c0_121 = arith.constant 0 : index
    %c36_122 = arith.constant 36 : index
    %135 = vector.load %arg1[%c1_120, %c0_121, %c36_122] : memref<2x4x342xbf16, #tpu.memory_space<vmem>>, vector<1x4x288xbf16>
    %136 = vector.shape_cast %135 : vector<1x4x288xbf16> to vector<4x288xbf16>
    %137 = arith.extf %136 : vector<4x288xbf16> to vector<4x288xf32>
    %c24_123 = arith.constant 24 : index
    %c0_124 = arith.constant 0 : index
    %138 = vector.load %arg8[%c24_123, %c0_124] : memref<36x288xf32, #tpu.memory_space<vmem>>, vector<4x288xf32>
    tpu.vector_store %arg8[%c24_123, %c0_124], %137 {strides = array<i32>} : memref<36x288xf32, #tpu.memory_space<vmem>>, vector<4x288xf32>,
    %c1_125 = arith.constant 1 : index
    %c0_126 = arith.constant 0 : index
    %c37_127 = arith.constant 37 : index
    %139 = vector.load %arg1[%c1_125, %c0_126, %c37_127] : memref<2x4x342xbf16, #tpu.memory_space<vmem>>, vector<1x4x288xbf16>
    %140 = vector.shape_cast %139 : vector<1x4x288xbf16> to vector<4x288xbf16>
    %141 = arith.extf %140 : vector<4x288xbf16> to vector<4x288xf32>
    %c28_128 = arith.constant 28 : index
    %c0_129 = arith.constant 0 : index
    %142 = vector.load %arg8[%c28_128, %c0_129] : memref<36x288xf32, #tpu.memory_space<vmem>>, vector<4x288xf32>
    tpu.vector_store %arg8[%c28_128, %c0_129], %141 {strides = array<i32>} : memref<36x288xf32, #tpu.memory_space<vmem>>, vector<4x288xf32>,
    %c1_130 = arith.constant 1 : index
    %c0_131 = arith.constant 0 : index
    %c38_132 = arith.constant 38 : index
    %143 = vector.load %arg1[%c1_130, %c0_131, %c38_132] : memref<2x4x342xbf16, #tpu.memory_space<vmem>>, vector<1x4x288xbf16>
    %144 = vector.shape_cast %143 : vector<1x4x288xbf16> to vector<4x288xbf16>
    %145 = arith.extf %144 : vector<4x288xbf16> to vector<4x288xf32>
    %c32_133 = arith.constant 32 : index
    %c0_134 = arith.constant 0 : index
    %146 = vector.load %arg8[%c32_133, %c0_134] : memref<36x288xf32, #tpu.memory_space<vmem>>, vector<4x288xf32>
    tpu.vector_store %arg8[%c32_133, %c0_134], %145 {strides = array<i32>} : memref<36x288xf32, #tpu.memory_space<vmem>>, vector<4x288xf32>,
    %c0_135 = arith.constant 0 : index
    %c0_136 = arith.constant 0 : index
    %147 = vector.load %arg8[%c0_135, %c0_136] : memref<36x288xf32, #tpu.memory_space<vmem>>, vector<36x288xf32>
    %148 = arith.truncf %147 : vector<36x288xf32> to vector<36x288xbf16>
    %cst_137 = arith.constant dense<0.000000e+00> : vector<8x288xf32>
    %149 = tpu.matmul %23, %148, %cst_137 {dimension_numbers = #tpu.dot_dimension_numbers<[1], [0], [0], [1], [0, 0, 1, 1], [], []>} : vector<8x36xbf16>, vector<36x288xbf16>, vector<8x288xf32> -> vector<8x288xf32>
    %150 = vector.broadcast %24 : vector<8x1xf32> to vector<8x288xf32>
    %151 = arith.addf %149, %150 : vector<8x288xf32>
    %cst_138 = arith.constant 0.000000e+00 : f32
    %152 = vector.broadcast %cst_138 : f32 to vector<8x288xf32>
    %153 = arith.maximumf %151, %152 : vector<8x288xf32>
    %cst_139 = arith.constant 0.000000e+00 : f32
    %154 = vector.broadcast %cst_139 : f32 to vector<8x288xf32>
    %155 = arith.select %22, %153, %154 : vector<8x288xi1>, vector<8x288xf32>
    %156 = arith.truncf %155 : vector<8x288xf32> to vector<8x288xbf16>
    %c0_140 = arith.constant 0 : index
    %c19_141 = arith.constant 19 : index
    %157 = vector.load %arg7[%c0_140, %c19_141] : memref<8x342xbf16, #tpu.memory_space<vmem>>, vector<8x288xbf16>
    tpu.vector_store %arg7[%c0_140, %c19_141], %156 {strides = array<i32>} : memref<8x342xbf16, #tpu.memory_space<vmem>>, vector<8x288xbf16>,
    %c0_142 = arith.constant 0 : index
    %c0_143 = arith.constant 0 : index
    %158 = vector.load %arg7[%c0_142, %c0_143] : memref<8x342xbf16, #tpu.memory_space<vmem>>, vector<8x288xbf16>
    %159 = arith.extf %158 : vector<8x288xbf16> to vector<8x288xf32>
    %c0_144 = arith.constant 0 : index
    %c0_145 = arith.constant 0 : index
    %160 = vector.load %arg9[%c0_144, %c0_145] : memref<72x288xf32, #tpu.memory_space<vmem>>, vector<8x288xf32>
    tpu.vector_store %arg9[%c0_144, %c0_145], %159 {strides = array<i32>} : memref<72x288xf32, #tpu.memory_space<vmem>>, vector<8x288xf32>,
    %c0_146 = arith.constant 0 : index
    %c1_147 = arith.constant 1 : index
    %161 = vector.load %arg7[%c0_146, %c1_147] : memref<8x342xbf16, #tpu.memory_space<vmem>>, vector<8x288xbf16>
    %162 = arith.extf %161 : vector<8x288xbf16> to vector<8x288xf32>
    %c8_148 = arith.constant 8 : index
    %c0_149 = arith.constant 0 : index
    %163 = vector.load %arg9[%c8_148, %c0_149] : memref<72x288xf32, #tpu.memory_space<vmem>>, vector<8x288xf32>
    tpu.vector_store %arg9[%c8_148, %c0_149], %162 {strides = array<i32>} : memref<72x288xf32, #tpu.memory_space<vmem>>, vector<8x288xf32>,
    %c0_150 = arith.constant 0 : index
    %c2_151 = arith.constant 2 : index
    %164 = vector.load %arg7[%c0_150, %c2_151] : memref<8x342xbf16, #tpu.memory_space<vmem>>, vector<8x288xbf16>
    %165 = arith.extf %164 : vector<8x288xbf16> to vector<8x288xf32>
    %c16_152 = arith.constant 16 : index
    %c0_153 = arith.constant 0 : index
    %166 = vector.load %arg9[%c16_152, %c0_153] : memref<72x288xf32, #tpu.memory_space<vmem>>, vector<8x288xf32>
    tpu.vector_store %arg9[%c16_152, %c0_153], %165 {strides = array<i32>} : memref<72x288xf32, #tpu.memory_space<vmem>>, vector<8x288xf32>,
    %c0_154 = arith.constant 0 : index
    %c18_155 = arith.constant 18 : index
    %167 = vector.load %arg7[%c0_154, %c18_155] : memref<8x342xbf16, #tpu.memory_space<vmem>>, vector<8x288xbf16>
    %168 = arith.extf %167 : vector<8x288xbf16> to vector<8x288xf32>
    %c24_156 = arith.constant 24 : index
    %c0_157 = arith.constant 0 : index
    %169 = vector.load %arg9[%c24_156, %c0_157] : memref<72x288xf32, #tpu.memory_space<vmem>>, vector<8x288xf32>
    tpu.vector_store %arg9[%c24_156, %c0_157], %168 {strides = array<i32>} : memref<72x288xf32, #tpu.memory_space<vmem>>, vector<8x288xf32>,
    %c0_158 = arith.constant 0 : index
    %c19_159 = arith.constant 19 : index
    %170 = vector.load %arg7[%c0_158, %c19_159] : memref<8x342xbf16, #tpu.memory_space<vmem>>, vector<8x288xbf16>
    %171 = arith.extf %170 : vector<8x288xbf16> to vector<8x288xf32>
    %c32_160 = arith.constant 32 : index
    %c0_161 = arith.constant 0 : index
    %172 = vector.load %arg9[%c32_160, %c0_161] : memref<72x288xf32, #tpu.memory_space<vmem>>, vector<8x288xf32>
    tpu.vector_store %arg9[%c32_160, %c0_161], %171 {strides = array<i32>} : memref<72x288xf32, #tpu.memory_space<vmem>>, vector<8x288xf32>,
    %c0_162 = arith.constant 0 : index
    %c20_163 = arith.constant 20 : index
    %173 = vector.load %arg7[%c0_162, %c20_163] : memref<8x342xbf16, #tpu.memory_space<vmem>>, vector<8x288xbf16>
    %174 = arith.extf %173 : vector<8x288xbf16> to vector<8x288xf32>
    %c40_164 = arith.constant 40 : index
    %c0_165 = arith.constant 0 : index
    %175 = vector.load %arg9[%c40_164, %c0_165] : memref<72x288xf32, #tpu.memory_space<vmem>>, vector<8x288xf32>
    tpu.vector_store %arg9[%c40_164, %c0_165], %174 {strides = array<i32>} : memref<72x288xf32, #tpu.memory_space<vmem>>, vector<8x288xf32>,
    %c0_166 = arith.constant 0 : index
    %c36_167 = arith.constant 36 : index
    %176 = vector.load %arg7[%c0_166, %c36_167] : memref<8x342xbf16, #tpu.memory_space<vmem>>, vector<8x288xbf16>
    %177 = arith.extf %176 : vector<8x288xbf16> to vector<8x288xf32>
    %c48_168 = arith.constant 48 : index
    %c0_169 = arith.constant 0 : index
    %178 = vector.load %arg9[%c48_168, %c0_169] : memref<72x288xf32, #tpu.memory_space<vmem>>, vector<8x288xf32>
    tpu.vector_store %arg9[%c48_168, %c0_169], %177 {strides = array<i32>} : memref<72x288xf32, #tpu.memory_space<vmem>>, vector<8x288xf32>,
    %c0_170 = arith.constant 0 : index
    %c37_171 = arith.constant 37 : index
    %179 = vector.load %arg7[%c0_170, %c37_171] : memref<8x342xbf16, #tpu.memory_space<vmem>>, vector<8x288xbf16>
    %180 = arith.extf %179 : vector<8x288xbf16> to vector<8x288xf32>
    %c56_172 = arith.constant 56 : index
    %c0_173 = arith.constant 0 : index
    %181 = vector.load %arg9[%c56_172, %c0_173] : memref<72x288xf32, #tpu.memory_space<vmem>>, vector<8x288xf32>
    tpu.vector_store %arg9[%c56_172, %c0_173], %180 {strides = array<i32>} : memref<72x288xf32, #tpu.memory_space<vmem>>, vector<8x288xf32>,
    %c0_174 = arith.constant 0 : index
    %c38_175 = arith.constant 38 : index
    %182 = vector.load %arg7[%c0_174, %c38_175] : memref<8x342xbf16, #tpu.memory_space<vmem>>, vector<8x288xbf16>
    %183 = arith.extf %182 : vector<8x288xbf16> to vector<8x288xf32>
    %c64_176 = arith.constant 64 : index
    %c0_177 = arith.constant 0 : index
    %184 = vector.load %arg9[%c64_176, %c0_177] : memref<72x288xf32, #tpu.memory_space<vmem>>, vector<8x288xf32>
    tpu.vector_store %arg9[%c64_176, %c0_177], %183 {strides = array<i32>} : memref<72x288xf32, #tpu.memory_space<vmem>>, vector<8x288xf32>,
    %c0_178 = arith.constant 0 : index
    %c0_179 = arith.constant 0 : index
    %185 = vector.load %arg9[%c0_178, %c0_179] : memref<72x288xf32, #tpu.memory_space<vmem>>, vector<72x288xf32>
    %186 = arith.truncf %185 : vector<72x288xf32> to vector<72x288xbf16>
    %cst_180 = arith.constant dense<0.000000e+00> : vector<8x288xf32>
    %187 = tpu.matmul %25, %186, %cst_180 {dimension_numbers = #tpu.dot_dimension_numbers<[1], [0], [0], [1], [0, 0, 1, 1], [], []>} : vector<8x72xbf16>, vector<72x288xbf16>, vector<8x288xf32> -> vector<8x288xf32>
    %188 = vector.broadcast %26 : vector<8x1xf32> to vector<8x288xf32>
    %189 = arith.addf %187, %188 : vector<8x288xf32>
    %cst_181 = arith.constant 0.000000e+00 : f32
    %190 = vector.broadcast %cst_181 : f32 to vector<8x288xf32>
    %191 = arith.maximumf %189, %190 : vector<8x288xf32>
    %c1_182 = arith.constant 1 : index
    %c0_183 = arith.constant 0 : index
    %c0_184 = arith.constant 0 : index
    %192 = vector.load %arg6[%c1_182, %c0_183, %c0_184] : memref<2x8x288xf32, #tpu.memory_space<vmem>>, vector<1x8x288xf32>
    %193 = vector.shape_cast %192 : vector<1x8x288xf32> to vector<8x288xf32>
    %194 = vector.shape_cast %191 : vector<8x288xf32> to vector<1x8x288xf32>
    tpu.vector_store %arg6[%c1_182, %c0_183, %c0_184], %194 {strides = array<i32>} : memref<2x8x288xf32, #tpu.memory_space<vmem>>, vector<1x8x288xf32>,
    return
  }
  func.func @transform_0(%arg0: i32) -> (i32, i32, i32) {
    %c0_i32 = arith.constant 0 : i32
    %c0_i32_0 = arith.constant 0 : i32
    %c0_i32_1 = arith.constant 0 : i32
    return %arg0, %c0_i32, %c0_i32_0 : i32, i32, i32
  }
  func.func @transform_1(%arg0: i32) -> (i32, i32) {
    %c0_i32 = arith.constant 0 : i32
    %c0_i32_0 = arith.constant 0 : i32
    %c0_i32_1 = arith.constant 0 : i32
    return %c0_i32, %c0_i32_0 : i32, i32
  }
  func.func @transform_2(%arg0: i32) -> (i32, i32) {
    %c0_i32 = arith.constant 0 : i32
    %c0_i32_0 = arith.constant 0 : i32
    %c0_i32_1 = arith.constant 0 : i32
    return %c0_i32, %c0_i32_0 : i32, i32
  }
  func.func @transform_3(%arg0: i32) -> (i32, i32) {
    %c0_i32 = arith.constant 0 : i32
    %c0_i32_0 = arith.constant 0 : i32
    %c0_i32_1 = arith.constant 0 : i32
    return %c0_i32, %c0_i32_0 : i32, i32
  }
  func.func @transform_4(%arg0: i32) -> (i32, i32) {
    %c0_i32 = arith.constant 0 : i32
    %c0_i32_0 = arith.constant 0 : i32
    %c0_i32_1 = arith.constant 0 : i32
    return %c0_i32, %c0_i32_0 : i32, i32
  }
  func.func @transform_5(%arg0: i32) -> (i32, i32, i32) {
    %c0_i32 = arith.constant 0 : i32
    %c0_i32_0 = arith.constant 0 : i32
    %c0_i32_1 = arith.constant 0 : i32
    return %arg0, %c0_i32, %c0_i32_0 : i32, i32, i32
  }
}

</mosaic_0001>

<llo_original>
// kernel: tpu_custom_call.1
$region0: #{tpu_custom_call.1}
  #allocation0 [shape = 'u32[]', space=smem, size = 0x4, offset = 0x4, fixed_abs, tag = 'smem constant byte address 0x4 - core index']
  #allocation1 [shape = 'u32[144,128]{1,0:T(1,128)}', space=vmem, size = 0x12000, scoped, tag = 'internal scratch']
  #allocation2 [shape = 'bf16[8,342]{1,0:T(8,128)(2,1)}', space=vmem, size = 0x1800, scoped, tag = 'scratch operand']
  #allocation3 [shape = 'f32[36,288]{1,0:T(8,128)}', space=vmem, size = 0xf000, scoped, tag = 'scratch operand']
  #allocation4 [shape = 'f32[72,288]{1,0:T(8,128)}', space=vmem, size = 0x1b000, scoped, tag = 'scratch operand']
  %s0 = inlined_call_operand.vmem [shape: bf16[2,4,342], index: 0, kind: input, shape index: {}]
  %s1 = inlined_call_operand.vmem [shape: bf16[8,36], index: 1, kind: input, shape index: {}]
  %s2 = inlined_call_operand.vmem [shape: f32[8,1], index: 2, kind: input, shape index: {}]
  %s3 = inlined_call_operand.vmem [shape: bf16[8,72], index: 3, kind: input, shape index: {}]
  %s4 = inlined_call_operand.vmem [shape: f32[8,1], index: 4, kind: input, shape index: {}]
  %s5 = inlined_call_operand.hbm [shape: f32[2,8,288], index: 5, kind: output, shape index: {}]
  %s6 = sld [smem:[#allocation0]]
  $region30: #{tpu_custom_call.1} parent=0
    _
  %s8 = ssub.s32 1, %s6
  %s9 = scalar_select 0, %s8, %s6
  $region1: #{tpu_custom_call.1} parent=0
    #allocation5 [shape = 'u8[24576]{0}', space=vmem, size = 0x6000, scoped, tag = 'output window, operand 0, single buffered']
    #allocation6 [shape = 's32[1]{0}', space=sflag, size = 0x4, scoped, tag = 'scoped memory for tpu_custom_call.1']
    %10 = vsyncpa [#allocation6], 0
    // Predicated region
    $region2: #{tpu_custom_call.1} parent=1 // pred_check
      _
    $region3: #{tpu_custom_call.1} parent=1 // pred_check_branch
      %12 = sbr.rel (0) target = $region5
    $region4: #{tpu_custom_call.1} parent=1 // pred_region
      _
    $region5: #{tpu_custom_call.1} parent=1 // pred_fallthru
      _
    // Predicated region
    $region6: #{tpu_custom_call.1} parent=1 // pred_check
      _
    $region7: #{tpu_custom_call.1} parent=1 // pred_check_branch
      %14 = sbr.rel (0) target = $region9
    $region8: #{tpu_custom_call.1} parent=1 // pred_region
      _
    $region9: #{tpu_custom_call.1} parent=1 // pred_fallthru
      _
    // Predicated region
    $region10: #{tpu_custom_call.1} parent=1 // pred_check
      _
    $region11: #{tpu_custom_call.1} parent=1 // pred_check_branch
      %16 = sbr.rel (0) target = $region13
    $region12: #{tpu_custom_call.1} parent=1 // pred_region
      _
    $region13: #{tpu_custom_call.1} parent=1 // pred_fallthru
      _
    // Predicated region
    $region14: #{tpu_custom_call.1} parent=1 // pred_check
      _
    $region15: #{tpu_custom_call.1} parent=1 // pred_check_branch
      %18 = sbr.rel (0) target = $region17
    $region16: #{tpu_custom_call.1} parent=1 // pred_region
      _
    $region17: #{tpu_custom_call.1} parent=1 // pred_fallthru
      _
    // Predicated region
    $region18: #{tpu_custom_call.1} parent=1 // pred_check
      _
    $region19: #{tpu_custom_call.1} parent=1 // pred_check_branch
      %20 = sbr.rel (0) target = $region21
    $region20: #{tpu_custom_call.1} parent=1 // pred_region
      _
    $region21: #{tpu_custom_call.1} parent=1 // pred_fallthru
      _
    %vm22 = vcmask 150528
    %23 = vst.msk [vmem:[#allocation2] sm:$0xf] %vm22, 0
    %vm24 = vcmask 699800
    %25 = vst.msk [vmem:[#allocation2 + $0x8] sm:$0xf] %vm24, 0
    %v26 = vlaneseq
    %v27 = vand.u32 %v26, 127
    %v28 = vadd.s32 %v27, 128
    %v29 = vadd.s32 %v27, 256
    %vm30 = vcmp.lt.s32.totalorder %v27, 0
    %v31 = vsub.s32 0, %v27
    %v32 = vsel %vm30, %v31, %v27
    %v33 = vmul.u32.u64.compose %v32, 3817748708
    %v34 = vextract.low.u32 %v33
    %v35 = vextract.high.u32 %v33
    %v36 = vshrl.u32 %v35, 4
    %v37 = vmul.u32 %v36, 18
    %v38 = vsub.s32 %v32, %v37
    %v39 = vsub.s32 0, %v38
    %v40 = vsel %vm30, %v39, %v38
    %vm41 = vcmp.lt.s32.totalorder %v28, 0
    %v42 = vsub.s32 0, %v28
    %v43 = vsel %vm41, %v42, %v28
    %v44 = vmul.u32.u64.compose %v43, 3817748708
    %v45 = vextract.low.u32 %v44
    %v46 = vextract.high.u32 %v44
    %v47 = vshrl.u32 %v46, 4
    %v48 = vmul.u32 %v47, 18
    %v49 = vsub.s32 %v43, %v48
    %v50 = vsub.s32 0, %v49
    %v51 = vsel %vm41, %v50, %v49
    %vm52 = vcmp.lt.s32.totalorder %v29, 0
    %v53 = vsub.s32 0, %v29
    %v54 = vsel %vm52, %v53, %v29
    %v55 = vmul.u32.u64.compose %v54, 3817748708
    %v56 = vextract.low.u32 %v55
    %v57 = vextract.high.u32 %v55
    %v58 = vshrl.u32 %v57, 4
    %v59 = vmul.u32 %v58, 18
    %v60 = vsub.s32 %v54, %v59
    %v61 = vsub.s32 0, %v60
    %v62 = vsel %vm52, %v61, %v60
    %vm63 = vcmp.ne.s32.totalorder %v40, 0
    %vm64 = vcmp.ne.s32.totalorder %v51, 0
    %vm65 = vcmp.ne.s32.totalorder %v62, 0
    %vm66 = vcmp.lt.s32.totalorder %v40, 0
    %vm67 = vcmp.lt.s32.totalorder %v51, 0
    %vm68 = vcmp.lt.s32.totalorder %v62, 0
    %vm69 = vmand %vm66, %vm63
    %vm70 = vmand %vm67, %vm64
    %vm71 = vmand %vm68, %vm65
    %v72 = vadd.s32 %v40, 18
    %v73 = vadd.s32 %v51, 18
    %v74 = vadd.s32 %v62, 18
    %v75 = vsel %vm69, %v72, %v40
    %v76 = vsel %vm70, %v73, %v51
    %v77 = vsel %vm71, %v74, %v62
    %vm78 = vcmp.lt.s32.totalorder %v75, 16
    %vm79 = vcmp.lt.s32.totalorder %v76, 16
    %vm80 = vcmp.lt.s32.totalorder %v77, 16
    %v81 = vld [vmem:[%s1] sm:$0xf]
    %v82 = vld [vmem:[%s2] sm:$0xff]
    %v83 = vld [vmem:[%s3] sm:$0xf]
    %v84 = vld [vmem:[%s4] sm:$0xff]
    %v85 = vld [vmem:[%s0] sm:$0x3f]
    %v86 = vunpack.c.l.bf16 %v85
    %v87 = vunpack.c.h.bf16 %v85
    %v89 = vcombine.high %v86, %v86
    %91 = vst [vmem:[#allocation3] sm:$0xf] %v86
    %92 = vst [vmem:[#allocation3 + $0x8] sm:$0xf] %v89
    %vm93 = vcmask 257024
    %94 = vst.msk [vmem:[#allocation3 + $0x10] sm:$0xf] %vm93, %v87
    %v95 = vld [vmem:[%s0] sm:$0x3f]
    %v96 = vunpack.c.l.bf16 %v95
    %v97 = vunpack.c.h.bf16 %v95
    %v100 = vcombine.low %v96, %v96
    %v101 = vcombine.low %v97, %v97
    %102 = vrot.lane.b32.xlu0 %v100, 127
    %v103 = vpop.permute.xlu0 %102
    %104 = vrot.lane.b32.xlu0 %v96, 127
    %v105 = vpop.permute.xlu0 %104
    %106 = vrot.lane.b32.xlu0 %v101, 127
    %v107 = vpop.permute.xlu0 %106
    %vm108 = vcmask 1039360
    %v109 = vsel %vm108, %v103, %v105
    %v110 = vsel %vm108, %v105, %v107
    %114 = vst [vmem:[#allocation3] sm:$0xf0] %v109
    %115 = vst [vmem:[#allocation3 + $0x8] sm:$0xf0] %v110
    %vm116 = vcmask 261124
    %117 = vst.msk [vmem:[#allocation3 + $0x10] sm:$0xf0] %vm116, %v107
    %v118 = vld [vmem:[%s0] sm:$0x3f]
    %v119 = vunpack.c.l.bf16 %v118
    %v120 = vunpack.c.h.bf16 %v118
    %v123 = vcombine.high %v119, %v119
    %124 = vrot.lane.b32.xlu0 %v119, 126
    %v125 = vpop.permute.xlu0 %124
    %126 = vrot.lane.b32.xlu0 %v123, 126
    %v127 = vpop.permute.xlu0 %126
    %128 = vrot.lane.b32.xlu0 %v120, 126
    %v129 = vpop.permute.xlu0 %128
    %vm130 = vcmask 1031168
    %v131 = vsel %vm130, %v125, %v127
    %v132 = vsel %vm130, %v127, %v129
    %136 = vst [vmem:[#allocation3 + $0x18] sm:$0xf] %v131
    %137 = vst [vmem:[#allocation3 + $0x20] sm:$0xf] %v132
    %138 = vst.msk [vmem:[#allocation3 + $0x28] sm:$0xf] %vm93, %v129
    %v139 = vld [vmem:[%s0] sm:$0x3f]
    %v140 = vunpack.c.l.bf16 %v139
    %v141 = vunpack.c.h.bf16 %v139
    %v144 = vcombine.low %v140, %v140
    %v145 = vcombine.low %v141, %v141
    %146 = vrot.lane.b32.xlu0 %v144, 110
    %v147 = vpop.permute.xlu0 %146
    %148 = vrot.lane.b32.xlu0 %v140, 110
    %v149 = vpop.permute.xlu0 %148
    %150 = vrot.lane.b32.xlu0 %v145, 110
    %v151 = vpop.permute.xlu0 %150
    %vm152 = vcmask 900096
    %v153 = vsel %vm152, %v147, %v149
    %v154 = vsel %vm152, %v149, %v151
    %158 = vst [vmem:[#allocation3 + $0x18] sm:$0xf0] %v153
    %159 = vst [vmem:[#allocation3 + $0x20] sm:$0xf0] %v154
    %160 = vst.msk [vmem:[#allocation3 + $0x28] sm:$0xf0] %vm116, %v151
    %v161 = vld [vmem:[%s0] sm:$0x3f]
    %v162 = vunpack.c.l.bf16 %v161
    %v163 = vunpack.c.h.bf16 %v161
    %v166 = vcombine.high %v162, %v162
    %167 = vrot.lane.b32.xlu0 %v162, 109
    %v168 = vpop.permute.xlu0 %167
    %169 = vrot.lane.b32.xlu0 %v166, 109
    %v170 = vpop.permute.xlu0 %169
    %171 = vrot.lane.b32.xlu0 %v163, 109
    %v172 = vpop.permute.xlu0 %171
    %vm173 = vcmask 891904
    %v174 = vsel %vm173, %v168, %v170
    %v175 = vsel %vm173, %v170, %v172
    %179 = vst [vmem:[#allocation3 + $0x30] sm:$0xf] %v174
    %180 = vst [vmem:[#allocation3 + $0x38] sm:$0xf] %v175
    %181 = vst.msk [vmem:[#allocation3 + $0x40] sm:$0xf] %vm93, %v172
    %v182 = vld [vmem:[%s0] sm:$0x3f]
    %v183 = vunpack.c.l.bf16 %v182
    %v184 = vunpack.c.h.bf16 %v182
    %v187 = vcombine.low %v183, %v183
    %v188 = vcombine.low %v184, %v184
    %189 = vrot.lane.b32.xlu0 %v187, 108
    %v190 = vpop.permute.xlu0 %189
    %191 = vrot.lane.b32.xlu0 %v183, 108
    %v192 = vpop.permute.xlu0 %191
    %193 = vrot.lane.b32.xlu0 %v188, 108
    %v194 = vpop.permute.xlu0 %193
    %vm195 = vcmask 883712
    %v196 = vsel %vm195, %v190, %v192
    %v197 = vsel %vm195, %v192, %v194
    %201 = vst [vmem:[#allocation3 + $0x30] sm:$0xf0] %v196
    %202 = vst [vmem:[#allocation3 + $0x38] sm:$0xf0] %v197
    %203 = vst.msk [vmem:[#allocation3 + $0x40] sm:$0xf0] %vm116, %v194
    %v204 = vld [vmem:[%s0] sm:$0x3f]
    %v205 = vunpack.c.l.bf16 %v204
    %v206 = vunpack.c.h.bf16 %v204
    %v209 = vcombine.high %v205, %v205
    %210 = vrot.lane.b32.xlu0 %v205, 92
    %v211 = vpop.permute.xlu0 %210
    %212 = vrot.lane.b32.xlu0 %v209, 92
    %v213 = vpop.permute.xlu0 %212
    %214 = vrot.lane.b32.xlu0 %v206, 92
    %v215 = vpop.permute.xlu0 %214
    %vm216 = vcmask 752640
    %v217 = vsel %vm216, %v211, %v213
    %v218 = vsel %vm216, %v213, %v215
    %222 = vst [vmem:[#allocation3 + $0x48] sm:$0xf] %v217
    %223 = vst [vmem:[#allocation3 + $0x50] sm:$0xf] %v218
    %224 = vst.msk [vmem:[#allocation3 + $0x58] sm:$0xf] %vm93, %v215
    %v225 = vld [vmem:[%s0] sm:$0x3f]
    %v226 = vunpack.c.l.bf16 %v225
    %v227 = vunpack.c.h.bf16 %v225
    %v230 = vcombine.low %v226, %v226
    %v231 = vcombine.low %v227, %v227
    %232 = vrot.lane.b32.xlu0 %v230, 91
    %v233 = vpop.permute.xlu0 %232
    %234 = vrot.lane.b32.xlu0 %v226, 91
    %v235 = vpop.permute.xlu0 %234
    %236 = vrot.lane.b32.xlu0 %v231, 91
    %v237 = vpop.permute.xlu0 %236
    %vm238 = vcmask 744448
    %v239 = vsel %vm238, %v233, %v235
    %v240 = vsel %vm238, %v235, %v237
    %244 = vst [vmem:[#allocation3 + $0x48] sm:$0xf0] %v239
    %245 = vst [vmem:[#allocation3 + $0x50] sm:$0xf0] %v240
    %246 = vst.msk [vmem:[#allocation3 + $0x58] sm:$0xf0] %vm116, %v237
    %v247 = vld [vmem:[%s0] sm:$0x3f]
    %v248 = vunpack.c.l.bf16 %v247
    %v249 = vunpack.c.h.bf16 %v247
    %v252 = vcombine.high %v248, %v248
    %253 = vrot.lane.b32.xlu0 %v248, 90
    %v254 = vpop.permute.xlu0 %253
    %255 = vrot.lane.b32.xlu0 %v252, 90
    %v256 = vpop.permute.xlu0 %255
    %257 = vrot.lane.b32.xlu0 %v249, 90
    %v258 = vpop.permute.xlu0 %257
    %vm259 = vcmask 736256
    %v260 = vsel %vm259, %v254, %v256
    %v261 = vsel %vm259, %v256, %v258
    %265 = vst [vmem:[#allocation3 + $0x60] sm:$0xf] %v260
    %266 = vst [vmem:[#allocation3 + $0x68] sm:$0xf] %v261
    %267 = vst.msk [vmem:[#allocation3 + $0x70] sm:$0xf] %vm93, %v258
    %v268 = vld [vmem:[#allocation3] sm:$0xff]
    %v269 = vld [vmem:[#allocation3 + $0x8] sm:$0xff]
    %v270 = vld [vmem:[#allocation3 + $0x10] sm:$0xff]
    %v271 = vld [vmem:[#allocation3 + $0x18] sm:$0xff]
    %v272 = vld [vmem:[#allocation3 + $0x20] sm:$0xff]
    %v273 = vld [vmem:[#allocation3 + $0x28] sm:$0xff]
    %v274 = vld [vmem:[#allocation3 + $0x30] sm:$0xff]
    %v275 = vld [vmem:[#allocation3 + $0x38] sm:$0xff]
    %v276 = vld [vmem:[#allocation3 + $0x40] sm:$0xff]
    %v277 = vld [vmem:[#allocation3 + $0x48] sm:$0xff]
    %v278 = vld [vmem:[#allocation3 + $0x50] sm:$0xff]
    %v279 = vld [vmem:[#allocation3 + $0x58] sm:$0xff]
    %v280 = vld [vmem:[#allocation3 + $0x60] sm:$0xf]
    %v281 = vld [vmem:[#allocation3 + $0x68] sm:$0xf]
    %v282 = vld [vmem:[#allocation3 + $0x70] sm:$0xf]
    %v283 = vpack.c.bf16 %v271, %v268
    %v284 = vpack.c.bf16 %v272, %v269
    %v285 = vpack.c.bf16 %v273, %v270
    %v286 = vpack.c.bf16 %v277, %v274
    %v287 = vpack.c.bf16 %v278, %v275
    %v288 = vpack.c.bf16 %v279, %v276
    %v289 = vpack.c.bf16 %v280, %v280
    %v290 = vpack.c.bf16 %v281, %v281
    %v291 = vpack.c.bf16 %v282, %v282
    %293 = vset.pattern.permute.xlu0 0
    %294 = vperm.xlu0 %293, %v82
    %v295 = vpop.permute.xlu0 %294
    %vm297 = vcmask 293888
    %v299 = vsel %vm297, %v81, 0
    %vm301 = vcmask 1041408
    %v303 = vsel %vm301, %v289, 0
    %v306 = vsel %vm301, %v290, 0
    %v309 = vsel %vm301, %v291, 0
    %311 = vmatprep.subr.bf16.mxu0 0
    %312 = vmatpush1.bf16.msra.mxu0 0
    %313 = vmatprep.subr.bf16.mxu0 0
    %314 = vmatpush1.bf16.msra.mxu0 0
    %315 = vmatprep.subr.bf16.mxu0 0
    %316 = vmatpush1.bf16.msra.mxu0 0
    %317 = vmatprep.subr.bf16.mxu0 0
    %318 = vmatpush1.bf16.msra.mxu0 0
    %319 = vmatprep.subr.bf16.mxu0 0
    %320 = vmatpush1.bf16.msra.mxu0 0
    %321 = vmatprep.subr.bf16.mxu0 %v306
    %322 = vmatpush1.bf16.msra.mxu0 %v303
    %323 = vmatprep.subr.bf16.mxu0 %v287
    %324 = vmatpush1.bf16.msra.mxu0 %v286
    %325 = vmatprep.subr.bf16.mxu0 %v284
    %326 = vmatpush1.bf16.msra.mxu0 %v283
    %327 = vmatprep.subr.bf16.mxu0 0
    %328 = vmatpush2.bf16.msra.mxu0 0
    %329 = vmatprep.subr.bf16.mxu0 0
    %330 = vmatpush2.bf16.msra.mxu0 0
    %331 = vmatprep.subr.bf16.mxu0 0
    %332 = vmatpush2.bf16.msra.mxu0 0
    %333 = vmatprep.subr.bf16.mxu0 0
    %334 = vmatpush2.bf16.msra.mxu0 0
    %335 = vmatprep.subr.bf16.mxu0 0
    %336 = vmatpush2.bf16.msra.mxu0 0
    %337 = vmatprep.subr.bf16.mxu0 0
    %338 = vmatpush2.bf16.msra.mxu0 0
    %339 = vmatprep.subr.bf16.mxu0 0
    %340 = vmatpush2.bf16.msra.mxu0 0
    %341 = vmatprep.subr.bf16.mxu0 0
    %342 = vmatpush2.bf16.msra.mxu0 0
    %343 = vmatprep.mubr.bf16.mxu0 0
    %344 = vmatmul.mubr.bf16.gmra.mxu0 %v299
    %v345 = vpop.f32.mrf.mxu0
    %v346 = vadd.f32 %v295, %v345
    %v347 = vpop.f32.mrf.mxu0
    %v348 = vadd.f32 %v295, %v347
    %v349 = vpop.f32.mrf.mxu0
    %v350 = vpop.f32.mrf.mxu0
    %351 = vdwg.mxu0
    %352 = vmatprep.subr.bf16.mxu0 0
    %353 = vmatpush1.bf16.msra.mxu0 0
    %354 = vmatprep.subr.bf16.mxu0 0
    %355 = vmatpush1.bf16.msra.mxu0 0
    %356 = vmatprep.subr.bf16.mxu0 0
    %357 = vmatpush1.bf16.msra.mxu0 0
    %358 = vmatprep.subr.bf16.mxu0 0
    %359 = vmatpush1.bf16.msra.mxu0 0
    %360 = vmatprep.subr.bf16.mxu0 0
    %361 = vmatpush1.bf16.msra.mxu0 0
    %362 = vmatprep.subr.bf16.mxu0 0
    %363 = vmatpush1.bf16.msra.mxu0 %v309
    %364 = vmatprep.subr.bf16.mxu0 0
    %365 = vmatpush1.bf16.msra.mxu0 %v288
    %366 = vmatprep.subr.bf16.mxu0 0
    %367 = vmatpush1.bf16.msra.mxu0 %v285
    %368 = vmatprep.subr.bf16.mxu0 0
    %369 = vmatpush2.bf16.msra.mxu0 0
    %370 = vmatprep.subr.bf16.mxu0 0
    %371 = vmatpush2.bf16.msra.mxu0 0
    %372 = vmatprep.subr.bf16.mxu0 0
    %373 = vmatpush2.bf16.msra.mxu0 0
    %374 = vmatprep.subr.bf16.mxu0 0
    %375 = vmatpush2.bf16.msra.mxu0 0
    %376 = vmatprep.subr.bf16.mxu0 0
    %377 = vmatpush2.bf16.msra.mxu0 0
    %378 = vmatprep.subr.bf16.mxu0 0
    %379 = vmatpush2.bf16.msra.mxu0 0
    %380 = vmatprep.subr.bf16.mxu0 0
    %381 = vmatpush2.bf16.msra.mxu0 0
    %382 = vmatprep.subr.bf16.mxu0 0
    %383 = vmatpush2.bf16.msra.mxu0 0
    %384 = vmatprep.mubr.bf16.mxu0 0
    %385 = vmatmul.mubr.bf16.gmra.mxu0 %v299
    %v386 = vpop.f32.mrf.mxu0
    %v387 = vadd.f32 %v295, %v386
    %v388 = vpop.f32.mrf.mxu0
    %v389 = vpop.f32.mrf.mxu0
    %v390 = vpop.f32.mrf.mxu0
    %391 = vdwg.mxu0
    %v392 = vmax.f32 %v346, 0.0
    %v393 = vmax.f32 %v348, 0.0
    %v394 = vmax.f32 %v387, 0.0
    %v395 = vsel %vm78, %v392, 0.0
    %v396 = vsel %vm79, %v393, 0.0
    %v397 = vsel %vm80, %v394, 0.0
    %v398 = vpack.c.bf16 %v395, %v395
    %v399 = vpack.c.bf16 %v396, %v396
    %v400 = vpack.c.bf16 %v397, %v397
    %v404 = vunpack.c.l.b16 %v398
    %v405 = vunpack.c.l.b16 %v399
    %v406 = vunpack.c.l.b16 %v400
    %v407 = vpack.c.b16 %v405, %v404
    %v408 = vpack.c.b16 %v406, %v406
    %409 = vrot.lane.b32.xlu0 %v407, 19
    %v410 = vpop.permute.xlu0 %409
    %411 = vrot.lane.b32.xlu0 %v408, 19
    %v412 = vpop.permute.xlu0 %411
    %v413 = vrot.slane %v410, 4
    %vm414 = vcmask 154624
    %v415 = vsel %vm414, %v413, %v410
    %v416 = vsel %vm414, %v413, %v412
    %vm419 = vcmask 1043608
    %vm420 = vcmask 1047556
    %vm421 = vmor %vm420, %vm419
    %422 = vst.msk [vmem:[#allocation2] sm:$0xff] %vm421, %v415
    %vm423 = vcmask 412672
    %424 = vst.msk [vmem:[#allocation2 + $0x8] sm:$0xf] %vm423, %v416
    %v425 = vld [vmem:[#allocation2] sm:$0xff]
    %v426 = vld [vmem:[#allocation2 + $0x8] sm:$0xf]
    %v427 = vunpack.c.l.bf16 %v425
    %v428 = vunpack.c.h.bf16 %v425
    %v429 = vunpack.c.l.bf16 %v426
    %430 = vst [vmem:[#allocation4] sm:$0xff] %v427
    %431 = vst [vmem:[#allocation4 + $0x8] sm:$0xff] %v428
    %vm432 = vcmask 261120
    %433 = vst.msk [vmem:[#allocation4 + $0x10] sm:$0xff] %vm432, %v429
    %v434 = vld [vmem:[#allocation2] sm:$0xff]
    %v435 = vld [vmem:[#allocation2 + $0x8] sm:$0xf]
    %v436 = vunpack.c.l.bf16 %v434
    %v437 = vunpack.c.h.bf16 %v434
    %v438 = vunpack.c.l.bf16 %v435
    %442 = vrot.lane.b32.xlu0 %v436, 127
    %v443 = vpop.permute.xlu0 %442
    %444 = vrot.lane.b32.xlu0 %v437, 127
    %v445 = vpop.permute.xlu0 %444
    %446 = vrot.lane.b32.xlu0 %v438, 127
    %v447 = vpop.permute.xlu0 %446
    %v448 = vsel %vm108, %v443, %v445
    %v449 = vsel %vm108, %v445, %v447
    %453 = vst [vmem:[#allocation4 + $0x18] sm:$0xff] %v448
    %454 = vst [vmem:[#allocation4 + $0x20] sm:$0xff] %v449
    %455 = vst.msk [vmem:[#allocation4 + $0x28] sm:$0xff] %vm432, %v447
    %v456 = vld [vmem:[#allocation2] sm:$0xff]
    %v457 = vld [vmem:[#allocation2 + $0x8] sm:$0xf]
    %v458 = vunpack.c.l.bf16 %v456
    %v459 = vunpack.c.h.bf16 %v456
    %v460 = vunpack.c.l.bf16 %v457
    %464 = vrot.lane.b32.xlu0 %v458, 126
    %v465 = vpop.permute.xlu0 %464
    %466 = vrot.lane.b32.xlu0 %v459, 126
    %v467 = vpop.permute.xlu0 %466
    %468 = vrot.lane.b32.xlu0 %v460, 126
    %v469 = vpop.permute.xlu0 %468
    %v470 = vsel %vm130, %v465, %v467
    %v471 = vsel %vm130, %v467, %v469
    %475 = vst [vmem:[#allocation4 + $0x30] sm:$0xff] %v470
    %476 = vst [vmem:[#allocation4 + $0x38] sm:$0xff] %v471
    %477 = vst.msk [vmem:[#allocation4 + $0x40] sm:$0xff] %vm432, %v469
    %v478 = vld [vmem:[#allocation2] sm:$0xff]
    %v479 = vld [vmem:[#allocation2 + $0x8] sm:$0xf]
    %v480 = vunpack.c.l.bf16 %v478
    %v481 = vunpack.c.h.bf16 %v478
    %v482 = vunpack.c.l.bf16 %v479
    %486 = vrot.lane.b32.xlu0 %v480, 110
    %v487 = vpop.permute.xlu0 %486
    %488 = vrot.lane.b32.xlu0 %v481, 110
    %v489 = vpop.permute.xlu0 %488
    %490 = vrot.lane.b32.xlu0 %v482, 110
    %v491 = vpop.permute.xlu0 %490
    %v492 = vsel %vm152, %v487, %v489
    %v493 = vsel %vm152, %v489, %v491
    %497 = vst [vmem:[#allocation4 + $0x48] sm:$0xff] %v492
    %498 = vst [vmem:[#allocation4 + $0x50] sm:$0xff] %v493
    %499 = vst.msk [vmem:[#allocation4 + $0x58] sm:$0xff] %vm432, %v491
    %v500 = vld [vmem:[#allocation2] sm:$0xff]
    %v501 = vld [vmem:[#allocation2 + $0x8] sm:$0xf]
    %v502 = vunpack.c.l.bf16 %v500
    %v503 = vunpack.c.h.bf16 %v500
    %v504 = vunpack.c.l.bf16 %v501
    %508 = vrot.lane.b32.xlu0 %v502, 109
    %v509 = vpop.permute.xlu0 %508
    %510 = vrot.lane.b32.xlu0 %v503, 109
    %v511 = vpop.permute.xlu0 %510
    %512 = vrot.lane.b32.xlu0 %v504, 109
    %v513 = vpop.permute.xlu0 %512
    %v514 = vsel %vm173, %v509, %v511
    %v515 = vsel %vm173, %v511, %v513
    %519 = vst [vmem:[#allocation4 + $0x60] sm:$0xff] %v514
    %520 = vst [vmem:[#allocation4 + $0x68] sm:$0xff] %v515
    %521 = vst.msk [vmem:[#allocation4 + $0x70] sm:$0xff] %vm432, %v513
    %v522 = vld [vmem:[#allocation2] sm:$0xff]
    %v523 = vld [vmem:[#allocation2 + $0x8] sm:$0xf]
    %v524 = vunpack.c.l.bf16 %v522
    %v525 = vunpack.c.h.bf16 %v522
    %v526 = vunpack.c.l.bf16 %v523
    %530 = vrot.lane.b32.xlu0 %v524, 108
    %v531 = vpop.permute.xlu0 %530
    %532 = vrot.lane.b32.xlu0 %v525, 108
    %v533 = vpop.permute.xlu0 %532
    %534 = vrot.lane.b32.xlu0 %v526, 108
    %v535 = vpop.permute.xlu0 %534
    %v536 = vsel %vm195, %v531, %v533
    %v537 = vsel %vm195, %v533, %v535
    %541 = vst [vmem:[#allocation4 + $0x78] sm:$0xff] %v536
    %542 = vst [vmem:[#allocation4 + $0x80] sm:$0xff] %v537
    %543 = vst.msk [vmem:[#allocation4 + $0x88] sm:$0xff] %vm432, %v535
    %v544 = vld [vmem:[#allocation2] sm:$0xff]
    %v545 = vld [vmem:[#allocation2 + $0x8] sm:$0xf]
    %v546 = vunpack.c.l.bf16 %v544
    %v547 = vunpack.c.h.bf16 %v544
    %v548 = vunpack.c.l.bf16 %v545
    %552 = vrot.lane.b32.xlu0 %v546, 92
    %v553 = vpop.permute.xlu0 %552
    %554 = vrot.lane.b32.xlu0 %v547, 92
    %v555 = vpop.permute.xlu0 %554
    %556 = vrot.lane.b32.xlu0 %v548, 92
    %v557 = vpop.permute.xlu0 %556
    %v558 = vsel %vm216, %v553, %v555
    %v559 = vsel %vm216, %v555, %v557
    %563 = vst [vmem:[#allocation4 + $0x90] sm:$0xff] %v558
    %564 = vst [vmem:[#allocation4 + $0x98] sm:$0xff] %v559
    %565 = vst.msk [vmem:[#allocation4 + $0xa0] sm:$0xff] %vm432, %v557
    %v566 = vld [vmem:[#allocation2] sm:$0xff]
    %v567 = vld [vmem:[#allocation2 + $0x8] sm:$0xf]
    %v568 = vunpack.c.l.bf16 %v566
    %v569 = vunpack.c.h.bf16 %v566
    %v570 = vunpack.c.l.bf16 %v567
    %574 = vrot.lane.b32.xlu0 %v568, 91
    %v575 = vpop.permute.xlu0 %574
    %576 = vrot.lane.b32.xlu0 %v569, 91
    %v577 = vpop.permute.xlu0 %576
    %578 = vrot.lane.b32.xlu0 %v570, 91
    %v579 = vpop.permute.xlu0 %578
    %v580 = vsel %vm238, %v575, %v577
    %v581 = vsel %vm238, %v577, %v579
    %585 = vst [vmem:[#allocation4 + $0xa8] sm:$0xff] %v580
    %586 = vst [vmem:[#allocation4 + $0xb0] sm:$0xff] %v581
    %587 = vst.msk [vmem:[#allocation4 + $0xb8] sm:$0xff] %vm432, %v579
    %v588 = vld [vmem:[#allocation2] sm:$0xff]
    %v589 = vld [vmem:[#allocation2 + $0x8] sm:$0xf]
    %v590 = vunpack.c.l.bf16 %v588
    %v591 = vunpack.c.h.bf16 %v588
    %v592 = vunpack.c.l.bf16 %v589
    %596 = vrot.lane.b32.xlu0 %v590, 90
    %v597 = vpop.permute.xlu0 %596
    %598 = vrot.lane.b32.xlu0 %v591, 90
    %v599 = vpop.permute.xlu0 %598
    %600 = vrot.lane.b32.xlu0 %v592, 90
    %v601 = vpop.permute.xlu0 %600
    %v602 = vsel %vm259, %v597, %v599
    %v603 = vsel %vm259, %v599, %v601
    %607 = vst [vmem:[#allocation4 + $0xc0] sm:$0xff] %v602
    %608 = vst [vmem:[#allocation4 + $0xc8] sm:$0xff] %v603
    %609 = vst.msk [vmem:[#allocation4 + $0xd0] sm:$0xff] %vm432, %v601
    %v610 = vld [vmem:[#allocation4] sm:$0xff]
    %v611 = vld [vmem:[#allocation4 + $0x8] sm:$0xff]
    %v612 = vld [vmem:[#allocation4 + $0x10] sm:$0xff]
    %v613 = vld [vmem:[#allocation4 + $0x18] sm:$0xff]
    %v614 = vld [vmem:[#allocation4 + $0x20] sm:$0xff]
    %v615 = vld [vmem:[#allocation4 + $0x28] sm:$0xff]
    %v616 = vld [vmem:[#allocation4 + $0x30] sm:$0xff]
    %v617 = vld [vmem:[#allocation4 + $0x38] sm:$0xff]
    %v618 = vld [vmem:[#allocation4 + $0x40] sm:$0xff]
    %v619 = vld [vmem:[#allocation4 + $0x48] sm:$0xff]
    %v620 = vld [vmem:[#allocation4 + $0x50] sm:$0xff]
    %v621 = vld [vmem:[#allocation4 + $0x58] sm:$0xff]
    %v622 = vld [vmem:[#allocation4 + $0x60] sm:$0xff]
    %v623 = vld [vmem:[#allocation4 + $0x68] sm:$0xff]
    %v624 = vld [vmem:[#allocation4 + $0x70] sm:$0xff]
    %v625 = vld [vmem:[#allocation4 + $0x78] sm:$0xff]
    %v626 = vld [vmem:[#allocation4 + $0x80] sm:$0xff]
    %v627 = vld [vmem:[#allocation4 + $0x88] sm:$0xff]
    %v628 = vld [vmem:[#allocation4 + $0x90] sm:$0xff]
    %v629 = vld [vmem:[#allocation4 + $0x98] sm:$0xff]
    %v630 = vld [vmem:[#allocation4 + $0xa0] sm:$0xff]
    %v631 = vld [vmem:[#allocation4 + $0xa8] sm:$0xff]
    %v632 = vld [vmem:[#allocation4 + $0xb0] sm:$0xff]
    %v633 = vld [vmem:[#allocation4 + $0xb8] sm:$0xff]
    %v634 = vld [vmem:[#allocation4 + $0xc0] sm:$0xff]
    %v635 = vld [vmem:[#allocation4 + $0xc8] sm:$0xff]
    %v636 = vld [vmem:[#allocation4 + $0xd0] sm:$0xff]
    %v637 = vpack.c.bf16 %v613, %v610
    %v638 = vpack.c.bf16 %v614, %v611
    %v639 = vpack.c.bf16 %v615, %v612
    %v640 = vpack.c.bf16 %v619, %v616
    %v641 = vpack.c.bf16 %v620, %v617
    %v642 = vpack.c.bf16 %v621, %v618
    %v643 = vpack.c.bf16 %v625, %v622
    %v644 = vpack.c.bf16 %v626, %v623
    %v645 = vpack.c.bf16 %v627, %v624
    %v646 = vpack.c.bf16 %v631, %v628
    %v647 = vpack.c.bf16 %v632, %v629
    %v648 = vpack.c.bf16 %v633, %v630
    %v649 = vpack.c.bf16 %v634, %v634
    %v650 = vpack.c.bf16 %v635, %v635
    %v651 = vpack.c.bf16 %v636, %v636
    %653 = vset.pattern.permute.xlu0 0
    %654 = vperm.xlu0 %653, %v84
    %v655 = vpop.permute.xlu0 %654
    %vm657 = vcmask 588800
    %v659 = vsel %vm657, %v83, 0
    %vm661 = vcmask 1043456
    %v663 = vsel %vm661, %v649, 0
    %v666 = vsel %vm661, %v650, 0
    %v669 = vsel %vm661, %v651, 0
    %671 = vmatprep.subr.bf16.mxu0 0
    %672 = vmatpush1.bf16.msra.mxu0 0
    %673 = vmatprep.subr.bf16.mxu0 0
    %674 = vmatpush1.bf16.msra.mxu0 0
    %675 = vmatprep.subr.bf16.mxu0 0
    %676 = vmatpush1.bf16.msra.mxu0 0
    %677 = vmatprep.subr.bf16.mxu0 %v666
    %678 = vmatpush1.bf16.msra.mxu0 %v663
    %679 = vmatprep.subr.bf16.mxu0 %v647
    %680 = vmatpush1.bf16.msra.mxu0 %v646
    %681 = vmatprep.subr.bf16.mxu0 %v644
    %682 = vmatpush1.bf16.msra.mxu0 %v643
    %683 = vmatprep.subr.bf16.mxu0 %v641
    %684 = vmatpush1.bf16.msra.mxu0 %v640
    %685 = vmatprep.subr.bf16.mxu0 %v638
    %686 = vmatpush1.bf16.msra.mxu0 %v637
    %687 = vmatprep.subr.bf16.mxu0 0
    %688 = vmatpush2.bf16.msra.mxu0 0
    %689 = vmatprep.subr.bf16.mxu0 0
    %690 = vmatpush2.bf16.msra.mxu0 0
    %691 = vmatprep.subr.bf16.mxu0 0
    %692 = vmatpush2.bf16.msra.mxu0 0
    %693 = vmatprep.subr.bf16.mxu0 0
    %694 = vmatpush2.bf16.msra.mxu0 0
    %695 = vmatprep.subr.bf16.mxu0 0
    %696 = vmatpush2.bf16.msra.mxu0 0
    %697 = vmatprep.subr.bf16.mxu0 0
    %698 = vmatpush2.bf16.msra.mxu0 0
    %699 = vmatprep.subr.bf16.mxu0 0
    %700 = vmatpush2.bf16.msra.mxu0 0
    %701 = vmatprep.subr.bf16.mxu0 0
    %702 = vmatpush2.bf16.msra.mxu0 0
    %703 = vmatprep.mubr.bf16.mxu0 0
    %704 = vmatmul.mubr.bf16.gmra.mxu0 %v659
    %v705 = vpop.f32.mrf.mxu0
    %v706 = vadd.f32 %v655, %v705
    %v707 = vpop.f32.mrf.mxu0
    %v708 = vadd.f32 %v655, %v707
    %v709 = vpop.f32.mrf.mxu0
    %v710 = vpop.f32.mrf.mxu0
    %711 = vdwg.mxu0
    %712 = vmatprep.subr.bf16.mxu0 0
    %713 = vmatpush1.bf16.msra.mxu0 0
    %714 = vmatprep.subr.bf16.mxu0 0
    %715 = vmatpush1.bf16.msra.mxu0 0
    %716 = vmatprep.subr.bf16.mxu0 0
    %717 = vmatpush1.bf16.msra.mxu0 0
    %718 = vmatprep.subr.bf16.mxu0 0
    %719 = vmatpush1.bf16.msra.mxu0 %v669
    %720 = vmatprep.subr.bf16.mxu0 0
    %721 = vmatpush1.bf16.msra.mxu0 %v648
    %722 = vmatprep.subr.bf16.mxu0 0
    %723 = vmatpush1.bf16.msra.mxu0 %v645
    %724 = vmatprep.subr.bf16.mxu0 0
    %725 = vmatpush1.bf16.msra.mxu0 %v642
    %726 = vmatprep.subr.bf16.mxu0 0
    %727 = vmatpush1.bf16.msra.mxu0 %v639
    %728 = vmatprep.subr.bf16.mxu0 0
    %729 = vmatpush2.bf16.msra.mxu0 0
    %730 = vmatprep.subr.bf16.mxu0 0
    %731 = vmatpush2.bf16.msra.mxu0 0
    %732 = vmatprep.subr.bf16.mxu0 0
    %733 = vmatpush2.bf16.msra.mxu0 0
    %734 = vmatprep.subr.bf16.mxu0 0
    %735 = vmatpush2.bf16.msra.mxu0 0
    %736 = vmatprep.subr.bf16.mxu0 0
    %737 = vmatpush2.bf16.msra.mxu0 0
    %738 = vmatprep.subr.bf16.mxu0 0
    %739 = vmatpush2.bf16.msra.mxu0 0
    %740 = vmatprep.subr.bf16.mxu0 0
    %741 = vmatpush2.bf16.msra.mxu0 0
    %742 = vmatprep.subr.bf16.mxu0 0
    %743 = vmatpush2.bf16.msra.mxu0 0
    %744 = vmatprep.mubr.bf16.mxu0 0
    %745 = vmatmul.mubr.bf16.gmra.mxu0 %v659
    %v746 = vpop.f32.mrf.mxu0
    %v747 = vadd.f32 %v655, %v746
    %v748 = vpop.f32.mrf.mxu0
    %v749 = vpop.f32.mrf.mxu0
    %v750 = vpop.f32.mrf.mxu0
    %751 = vdwg.mxu0
    %v752 = vmax.f32 %v706, 0.0
    %v753 = vmax.f32 %v708, 0.0
    %v754 = vmax.f32 %v747, 0.0
    %755 = vst [vmem:[#allocation5] sm:$0xff] %v752
    %756 = vst [vmem:[#allocation5 + $0x8] sm:$0xff] %v753
    %757 = vst.msk [vmem:[#allocation5 + $0x10] sm:$0xff] %vm432, %v754
    %s758 = scalar_lea.vmem %s0, 6
    %v759 = vld [vmem:[%s758] sm:$0x3f]
    %v760 = vunpack.c.l.bf16 %v759
    %v761 = vunpack.c.h.bf16 %v759
    %v763 = vcombine.high %v760, %v760
    %765 = vst [vmem:[#allocation3] sm:$0xf] %v760
    %766 = vst [vmem:[#allocation3 + $0x8] sm:$0xf] %v763
    %767 = vst.msk [vmem:[#allocation3 + $0x10] sm:$0xf] %vm93, %v761
    %v768 = vld [vmem:[%s758] sm:$0x3f]
    %v769 = vunpack.c.l.bf16 %v768
    %v770 = vunpack.c.h.bf16 %v768
    %v773 = vcombine.low %v769, %v769
    %v774 = vcombine.low %v770, %v770
    %775 = vrot.lane.b32.xlu0 %v773, 127
    %v776 = vpop.permute.xlu0 %775
    %777 = vrot.lane.b32.xlu0 %v769, 127
    %v778 = vpop.permute.xlu0 %777
    %779 = vrot.lane.b32.xlu0 %v774, 127
    %v780 = vpop.permute.xlu0 %779
    %v781 = vsel %vm108, %v776, %v778
    %v782 = vsel %vm108, %v778, %v780
    %786 = vst [vmem:[#allocation3] sm:$0xf0] %v781
    %787 = vst [vmem:[#allocation3 + $0x8] sm:$0xf0] %v782
    %788 = vst.msk [vmem:[#allocation3 + $0x10] sm:$0xf0] %vm116, %v780
    %v789 = vld [vmem:[%s758] sm:$0x3f]
    %v790 = vunpack.c.l.bf16 %v789
    %v791 = vunpack.c.h.bf16 %v789
    %v794 = vcombine.high %v790, %v790
    %795 = vrot.lane.b32.xlu0 %v790, 126
    %v796 = vpop.permute.xlu0 %795
    %797 = vrot.lane.b32.xlu0 %v794, 126
    %v798 = vpop.permute.xlu0 %797
    %799 = vrot.lane.b32.xlu0 %v791, 126
    %v800 = vpop.permute.xlu0 %799
    %v801 = vsel %vm130, %v796, %v798
    %v802 = vsel %vm130, %v798, %v800
    %806 = vst [vmem:[#allocation3 + $0x18] sm:$0xf] %v801
    %807 = vst [vmem:[#allocation3 + $0x20] sm:$0xf] %v802
    %808 = vst.msk [vmem:[#allocation3 + $0x28] sm:$0xf] %vm93, %v800
    %v809 = vld [vmem:[%s758] sm:$0x3f]
    %v810 = vunpack.c.l.bf16 %v809
    %v811 = vunpack.c.h.bf16 %v809
    %v814 = vcombine.low %v810, %v810
    %v815 = vcombine.low %v811, %v811
    %816 = vrot.lane.b32.xlu0 %v814, 110
    %v817 = vpop.permute.xlu0 %816
    %818 = vrot.lane.b32.xlu0 %v810, 110
    %v819 = vpop.permute.xlu0 %818
    %820 = vrot.lane.b32.xlu0 %v815, 110
    %v821 = vpop.permute.xlu0 %820
    %v822 = vsel %vm152, %v817, %v819
    %v823 = vsel %vm152, %v819, %v821
    %827 = vst [vmem:[#allocation3 + $0x18] sm:$0xf0] %v822
    %828 = vst [vmem:[#allocation3 + $0x20] sm:$0xf0] %v823
    %829 = vst.msk [vmem:[#allocation3 + $0x28] sm:$0xf0] %vm116, %v821
    %v830 = vld [vmem:[%s758] sm:$0x3f]
    %v831 = vunpack.c.l.bf16 %v830
    %v832 = vunpack.c.h.bf16 %v830
    %v835 = vcombine.high %v831, %v831
    %836 = vrot.lane.b32.xlu0 %v831, 109
    %v837 = vpop.permute.xlu0 %836
    %838 = vrot.lane.b32.xlu0 %v835, 109
    %v839 = vpop.permute.xlu0 %838
    %840 = vrot.lane.b32.xlu0 %v832, 109
    %v841 = vpop.permute.xlu0 %840
    %v842 = vsel %vm173, %v837, %v839
    %v843 = vsel %vm173, %v839, %v841
    %847 = vst [vmem:[#allocation3 + $0x30] sm:$0xf] %v842
    %848 = vst [vmem:[#allocation3 + $0x38] sm:$0xf] %v843
    %849 = vst.msk [vmem:[#allocation3 + $0x40] sm:$0xf] %vm93, %v841
    %v850 = vld [vmem:[%s758] sm:$0x3f]
    %v851 = vunpack.c.l.bf16 %v850
    %v852 = vunpack.c.h.bf16 %v850
    %v855 = vcombine.low %v851, %v851
    %v856 = vcombine.low %v852, %v852
    %857 = vrot.lane.b32.xlu0 %v855, 108
    %v858 = vpop.permute.xlu0 %857
    %859 = vrot.lane.b32.xlu0 %v851, 108
    %v860 = vpop.permute.xlu0 %859
    %861 = vrot.lane.b32.xlu0 %v856, 108
    %v862 = vpop.permute.xlu0 %861
    %v863 = vsel %vm195, %v858, %v860
    %v864 = vsel %vm195, %v860, %v862
    %868 = vst [vmem:[#allocation3 + $0x30] sm:$0xf0] %v863
    %869 = vst [vmem:[#allocation3 + $0x38] sm:$0xf0] %v864
    %870 = vst.msk [vmem:[#allocation3 + $0x40] sm:$0xf0] %vm116, %v862
    %v871 = vld [vmem:[%s758] sm:$0x3f]
    %v872 = vunpack.c.l.bf16 %v871
    %v873 = vunpack.c.h.bf16 %v871
    %v876 = vcombine.high %v872, %v872
    %877 = vrot.lane.b32.xlu0 %v872, 92
    %v878 = vpop.permute.xlu0 %877
    %879 = vrot.lane.b32.xlu0 %v876, 92
    %v880 = vpop.permute.xlu0 %879
    %881 = vrot.lane.b32.xlu0 %v873, 92
    %v882 = vpop.permute.xlu0 %881
    %v883 = vsel %vm216, %v878, %v880
    %v884 = vsel %vm216, %v880, %v882
    %888 = vst [vmem:[#allocation3 + $0x48] sm:$0xf] %v883
    %889 = vst [vmem:[#allocation3 + $0x50] sm:$0xf] %v884
    %890 = vst.msk [vmem:[#allocation3 + $0x58] sm:$0xf] %vm93, %v882
    %v891 = vld [vmem:[%s758] sm:$0x3f]
    %v892 = vunpack.c.l.bf16 %v891
    %v893 = vunpack.c.h.bf16 %v891
    %v896 = vcombine.low %v892, %v892
    %v897 = vcombine.low %v893, %v893
    %898 = vrot.lane.b32.xlu0 %v896, 91
    %v899 = vpop.permute.xlu0 %898
    %900 = vrot.lane.b32.xlu0 %v892, 91
    %v901 = vpop.permute.xlu0 %900
    %902 = vrot.lane.b32.xlu0 %v897, 91
    %v903 = vpop.permute.xlu0 %902
    %v904 = vsel %vm238, %v899, %v901
    %v905 = vsel %vm238, %v901, %v903
    %909 = vst [vmem:[#allocation3 + $0x48] sm:$0xf0] %v904
    %910 = vst [vmem:[#allocation3 + $0x50] sm:$0xf0] %v905
    %911 = vst.msk [vmem:[#allocation3 + $0x58] sm:$0xf0] %vm116, %v903
    %v912 = vld [vmem:[%s758] sm:$0x3f]
    %v913 = vunpack.c.l.bf16 %v912
    %v914 = vunpack.c.h.bf16 %v912
    %v917 = vcombine.high %v913, %v913
    %918 = vrot.lane.b32.xlu0 %v913, 90
    %v919 = vpop.permute.xlu0 %918
    %920 = vrot.lane.b32.xlu0 %v917, 90
    %v921 = vpop.permute.xlu0 %920
    %922 = vrot.lane.b32.xlu0 %v914, 90
    %v923 = vpop.permute.xlu0 %922
    %v924 = vsel %vm259, %v919, %v921
    %v925 = vsel %vm259, %v921, %v923
    %929 = vst [vmem:[#allocation3 + $0x60] sm:$0xf] %v924
    %930 = vst [vmem:[#allocation3 + $0x68] sm:$0xf] %v925
    %931 = vst.msk [vmem:[#allocation3 + $0x70] sm:$0xf] %vm93, %v923
    %v932 = vld [vmem:[#allocation3] sm:$0xff]
    %v933 = vld [vmem:[#allocation3 + $0x8] sm:$0xff]
    %v934 = vld [vmem:[#allocation3 + $0x10] sm:$0xff]
    %v935 = vld [vmem:[#allocation3 + $0x18] sm:$0xff]
    %v936 = vld [vmem:[#allocation3 + $0x20] sm:$0xff]
    %v937 = vld [vmem:[#allocation3 + $0x28] sm:$0xff]
    %v938 = vld [vmem:[#allocation3 + $0x30] sm:$0xff]
    %v939 = vld [vmem:[#allocation3 + $0x38] sm:$0xff]
    %v940 = vld [vmem:[#allocation3 + $0x40] sm:$0xff]
    %v941 = vld [vmem:[#allocation3 + $0x48] sm:$0xff]
    %v942 = vld [vmem:[#allocation3 + $0x50] sm:$0xff]
    %v943 = vld [vmem:[#allocation3 + $0x58] sm:$0xff]
    %v944 = vld [vmem:[#allocation3 + $0x60] sm:$0xf]
    %v945 = vld [vmem:[#allocation3 + $0x68] sm:$0xf]
    %v946 = vld [vmem:[#allocation3 + $0x70] sm:$0xf]
    %v947 = vpack.c.bf16 %v935, %v932
    %v948 = vpack.c.bf16 %v936, %v933
    %v949 = vpack.c.bf16 %v937, %v934
    %v950 = vpack.c.bf16 %v941, %v938
    %v951 = vpack.c.bf16 %v942, %v939
    %v952 = vpack.c.bf16 %v943, %v940
    %v953 = vpack.c.bf16 %v944, %v944
    %v954 = vpack.c.bf16 %v945, %v945
    %v955 = vpack.c.bf16 %v946, %v946
    %v957 = vsel %vm301, %v953, 0
    %v960 = vsel %vm301, %v954, 0
    %v963 = vsel %vm301, %v955, 0
    %965 = vmatprep.subr.bf16.mxu0 0
    %966 = vmatpush1.bf16.msra.mxu0 0
    %967 = vmatprep.subr.bf16.mxu0 0
    %968 = vmatpush1.bf16.msra.mxu0 0
    %969 = vmatprep.subr.bf16.mxu0 0
    %970 = vmatpush1.bf16.msra.mxu0 0
    %971 = vmatprep.subr.bf16.mxu0 0
    %972 = vmatpush1.bf16.msra.mxu0 0
    %973 = vmatprep.subr.bf16.mxu0 0
    %974 = vmatpush1.bf16.msra.mxu0 0
    %975 = vmatprep.subr.bf16.mxu0 %v960
    %976 = vmatpush1.bf16.msra.mxu0 %v957
    %977 = vmatprep.subr.bf16.mxu0 %v951
    %978 = vmatpush1.bf16.msra.mxu0 %v950
    %979 = vmatprep.subr.bf16.mxu0 %v948
    %980 = vmatpush1.bf16.msra.mxu0 %v947
    %981 = vmatprep.subr.bf16.mxu0 0
    %982 = vmatpush2.bf16.msra.mxu0 0
    %983 = vmatprep.subr.bf16.mxu0 0
    %984 = vmatpush2.bf16.msra.mxu0 0
    %985 = vmatprep.subr.bf16.mxu0 0
    %986 = vmatpush2.bf16.msra.mxu0 0
    %987 = vmatprep.subr.bf16.mxu0 0
    %988 = vmatpush2.bf16.msra.mxu0 0
    %989 = vmatprep.subr.bf16.mxu0 0
    %990 = vmatpush2.bf16.msra.mxu0 0
    %991 = vmatprep.subr.bf16.mxu0 0
    %992 = vmatpush2.bf16.msra.mxu0 0
    %993 = vmatprep.subr.bf16.mxu0 0
    %994 = vmatpush2.bf16.msra.mxu0 0
    %995 = vmatprep.subr.bf16.mxu0 0
    %996 = vmatpush2.bf16.msra.mxu0 0
    %997 = vmatprep.mubr.bf16.mxu0 0
    %998 = vmatmul.mubr.bf16.gmra.mxu0 %v299
    %v999 = vpop.f32.mrf.mxu0
    %v1000 = vadd.f32 %v295, %v999
    %v1001 = vpop.f32.mrf.mxu0
    %v1002 = vadd.f32 %v295, %v1001
    %v1003 = vpop.f32.mrf.mxu0
    %v1004 = vpop.f32.mrf.mxu0
    %1005 = vdwg.mxu0
    %1006 = vmatprep.subr.bf16.mxu0 0
    %1007 = vmatpush1.bf16.msra.mxu0 0
    %1008 = vmatprep.subr.bf16.mxu0 0
    %1009 = vmatpush1.bf16.msra.mxu0 0
    %1010 = vmatprep.subr.bf16.mxu0 0
    %1011 = vmatpush1.bf16.msra.mxu0 0
    %1012 = vmatprep.subr.bf16.mxu0 0
    %1013 = vmatpush1.bf16.msra.mxu0 0
    %1014 = vmatprep.subr.bf16.mxu0 0
    %1015 = vmatpush1.bf16.msra.mxu0 0
    %1016 = vmatprep.subr.bf16.mxu0 0
    %1017 = vmatpush1.bf16.msra.mxu0 %v963
    %1018 = vmatprep.subr.bf16.mxu0 0
    %1019 = vmatpush1.bf16.msra.mxu0 %v952
    %1020 = vmatprep.subr.bf16.mxu0 0
    %1021 = vmatpush1.bf16.msra.mxu0 %v949
    %1022 = vmatprep.subr.bf16.mxu0 0
    %1023 = vmatpush2.bf16.msra.mxu0 0
    %1024 = vmatprep.subr.bf16.mxu0 0
    %1025 = vmatpush2.bf16.msra.mxu0 0
    %1026 = vmatprep.subr.bf16.mxu0 0
    %1027 = vmatpush2.bf16.msra.mxu0 0
    %1028 = vmatprep.subr.bf16.mxu0 0
    %1029 = vmatpush2.bf16.msra.mxu0 0
    %1030 = vmatprep.subr.bf16.mxu0 0
    %1031 = vmatpush2.bf16.msra.mxu0 0
    %1032 = vmatprep.subr.bf16.mxu0 0
    %1033 = vmatpush2.bf16.msra.mxu0 0
    %1034 = vmatprep.subr.bf16.mxu0 0
    %1035 = vmatpush2.bf16.msra.mxu0 0
    %1036 = vmatprep.subr.bf16.mxu0 0
    %1037 = vmatpush2.bf16.msra.mxu0 0
    %1038 = vmatprep.mubr.bf16.mxu0 0
    %1039 = vmatmul.mubr.bf16.gmra.mxu0 %v299
    %v1040 = vpop.f32.mrf.mxu0
    %v1041 = vadd.f32 %v295, %v1040
    %v1042 = vpop.f32.mrf.mxu0
    %v1043 = vpop.f32.mrf.mxu0
    %v1044 = vpop.f32.mrf.mxu0
    %1045 = vdwg.mxu0
    %v1046 = vmax.f32 %v1000, 0.0
    %v1047 = vmax.f32 %v1002, 0.0
    %v1048 = vmax.f32 %v1041, 0.0
    %v1049 = vsel %vm78, %v1046, 0.0
    %v1050 = vsel %vm79, %v1047, 0.0
    %v1051 = vsel %vm80, %v1048, 0.0
    %v1052 = vpack.c.bf16 %v1049, %v1049
    %v1053 = vpack.c.bf16 %v1050, %v1050
    %v1054 = vpack.c.bf16 %v1051, %v1051
    %v1058 = vunpack.c.l.b16 %v1052
    %v1059 = vunpack.c.l.b16 %v1053
    %v1060 = vunpack.c.l.b16 %v1054
    %v1061 = vpack.c.b16 %v1059, %v1058
    %v1062 = vpack.c.b16 %v1060, %v1060
    %1063 = vrot.lane.b32.xlu0 %v1061, 19
    %v1064 = vpop.permute.xlu0 %1063
    %1065 = vrot.lane.b32.xlu0 %v1062, 19
    %v1066 = vpop.permute.xlu0 %1065
    %v1067 = vrot.slane %v1064, 4
    %v1068 = vsel %vm414, %v1067, %v1064
    %v1069 = vsel %vm414, %v1067, %v1066
    %1072 = vst.msk [vmem:[#allocation2] sm:$0xff] %vm421, %v1068
    %1073 = vst.msk [vmem:[#allocation2 + $0x8] sm:$0xf] %vm423, %v1069
    %v1074 = vld [vmem:[#allocation2] sm:$0xff]
    %v1075 = vld [vmem:[#allocation2 + $0x8] sm:$0xf]
    %v1076 = vunpack.c.l.bf16 %v1074
    %v1077 = vunpack.c.h.bf16 %v1074
    %v1078 = vunpack.c.l.bf16 %v1075
    %1079 = vst [vmem:[#allocation4] sm:$0xff] %v1076
    %1080 = vst [vmem:[#allocation4 + $0x8] sm:$0xff] %v1077
    %1081 = vst.msk [vmem:[#allocation4 + $0x10] sm:$0xff] %vm432, %v1078
    %v1082 = vld [vmem:[#allocation2] sm:$0xff]
    %v1083 = vld [vmem:[#allocation2 + $0x8] sm:$0xf]
    %v1084 = vunpack.c.l.bf16 %v1082
    %v1085 = vunpack.c.h.bf16 %v1082
    %v1086 = vunpack.c.l.bf16 %v1083
    %1090 = vrot.lane.b32.xlu0 %v1084, 127
    %v1091 = vpop.permute.xlu0 %1090
    %1092 = vrot.lane.b32.xlu0 %v1085, 127
    %v1093 = vpop.permute.xlu0 %1092
    %1094 = vrot.lane.b32.xlu0 %v1086, 127
    %v1095 = vpop.permute.xlu0 %1094
    %v1096 = vsel %vm108, %v1091, %v1093
    %v1097 = vsel %vm108, %v1093, %v1095
    %1101 = vst [vmem:[#allocation4 + $0x18] sm:$0xff] %v1096
    %1102 = vst [vmem:[#allocation4 + $0x20] sm:$0xff] %v1097
    %1103 = vst.msk [vmem:[#allocation4 + $0x28] sm:$0xff] %vm432, %v1095
    %v1104 = vld [vmem:[#allocation2] sm:$0xff]
    %v1105 = vld [vmem:[#allocation2 + $0x8] sm:$0xf]
    %v1106 = vunpack.c.l.bf16 %v1104
    %v1107 = vunpack.c.h.bf16 %v1104
    %v1108 = vunpack.c.l.bf16 %v1105
    %1112 = vrot.lane.b32.xlu0 %v1106, 126
    %v1113 = vpop.permute.xlu0 %1112
    %1114 = vrot.lane.b32.xlu0 %v1107, 126
    %v1115 = vpop.permute.xlu0 %1114
    %1116 = vrot.lane.b32.xlu0 %v1108, 126
    %v1117 = vpop.permute.xlu0 %1116
    %v1118 = vsel %vm130, %v1113, %v1115
    %v1119 = vsel %vm130, %v1115, %v1117
    %1123 = vst [vmem:[#allocation4 + $0x30] sm:$0xff] %v1118
    %1124 = vst [vmem:[#allocation4 + $0x38] sm:$0xff] %v1119
    %1125 = vst.msk [vmem:[#allocation4 + $0x40] sm:$0xff] %vm432, %v1117
    %v1126 = vld [vmem:[#allocation2] sm:$0xff]
    %v1127 = vld [vmem:[#allocation2 + $0x8] sm:$0xf]
    %v1128 = vunpack.c.l.bf16 %v1126
    %v1129 = vunpack.c.h.bf16 %v1126
    %v1130 = vunpack.c.l.bf16 %v1127
    %1134 = vrot.lane.b32.xlu0 %v1128, 110
    %v1135 = vpop.permute.xlu0 %1134
    %1136 = vrot.lane.b32.xlu0 %v1129, 110
    %v1137 = vpop.permute.xlu0 %1136
    %1138 = vrot.lane.b32.xlu0 %v1130, 110
    %v1139 = vpop.permute.xlu0 %1138
    %v1140 = vsel %vm152, %v1135, %v1137
    %v1141 = vsel %vm152, %v1137, %v1139
    %1145 = vst [vmem:[#allocation4 + $0x48] sm:$0xff] %v1140
    %1146 = vst [vmem:[#allocation4 + $0x50] sm:$0xff] %v1141
    %1147 = vst.msk [vmem:[#allocation4 + $0x58] sm:$0xff] %vm432, %v1139
    %v1148 = vld [vmem:[#allocation2] sm:$0xff]
    %v1149 = vld [vmem:[#allocation2 + $0x8] sm:$0xf]
    %v1150 = vunpack.c.l.bf16 %v1148
    %v1151 = vunpack.c.h.bf16 %v1148
    %v1152 = vunpack.c.l.bf16 %v1149
    %1156 = vrot.lane.b32.xlu0 %v1150, 109
    %v1157 = vpop.permute.xlu0 %1156
    %1158 = vrot.lane.b32.xlu0 %v1151, 109
    %v1159 = vpop.permute.xlu0 %1158
    %1160 = vrot.lane.b32.xlu0 %v1152, 109
    %v1161 = vpop.permute.xlu0 %1160
    %v1162 = vsel %vm173, %v1157, %v1159
    %v1163 = vsel %vm173, %v1159, %v1161
    %1167 = vst [vmem:[#allocation4 + $0x60] sm:$0xff] %v1162
    %1168 = vst [vmem:[#allocation4 + $0x68] sm:$0xff] %v1163
    %1169 = vst.msk [vmem:[#allocation4 + $0x70] sm:$0xff] %vm432, %v1161
    %v1170 = vld [vmem:[#allocation2] sm:$0xff]
    %v1171 = vld [vmem:[#allocation2 + $0x8] sm:$0xf]
    %v1172 = vunpack.c.l.bf16 %v1170
    %v1173 = vunpack.c.h.bf16 %v1170
    %v1174 = vunpack.c.l.bf16 %v1171
    %1178 = vrot.lane.b32.xlu0 %v1172, 108
    %v1179 = vpop.permute.xlu0 %1178
    %1180 = vrot.lane.b32.xlu0 %v1173, 108
    %v1181 = vpop.permute.xlu0 %1180
    %1182 = vrot.lane.b32.xlu0 %v1174, 108
    %v1183 = vpop.permute.xlu0 %1182
    %v1184 = vsel %vm195, %v1179, %v1181
    %v1185 = vsel %vm195, %v1181, %v1183
    %1189 = vst [vmem:[#allocation4 + $0x78] sm:$0xff] %v1184
    %1190 = vst [vmem:[#allocation4 + $0x80] sm:$0xff] %v1185
    %1191 = vst.msk [vmem:[#allocation4 + $0x88] sm:$0xff] %vm432, %v1183
    %v1192 = vld [vmem:[#allocation2] sm:$0xff]
    %v1193 = vld [vmem:[#allocation2 + $0x8] sm:$0xf]
    %v1194 = vunpack.c.l.bf16 %v1192
    %v1195 = vunpack.c.h.bf16 %v1192
    %v1196 = vunpack.c.l.bf16 %v1193
    %1200 = vrot.lane.b32.xlu0 %v1194, 92
    %v1201 = vpop.permute.xlu0 %1200
    %1202 = vrot.lane.b32.xlu0 %v1195, 92
    %v1203 = vpop.permute.xlu0 %1202
    %1204 = vrot.lane.b32.xlu0 %v1196, 92
    %v1205 = vpop.permute.xlu0 %1204
    %v1206 = vsel %vm216, %v1201, %v1203
    %v1207 = vsel %vm216, %v1203, %v1205
    %1211 = vst [vmem:[#allocation4 + $0x90] sm:$0xff] %v1206
    %1212 = vst [vmem:[#allocation4 + $0x98] sm:$0xff] %v1207
    %1213 = vst.msk [vmem:[#allocation4 + $0xa0] sm:$0xff] %vm432, %v1205
    %v1214 = vld [vmem:[#allocation2] sm:$0xff]
    %v1215 = vld [vmem:[#allocation2 + $0x8] sm:$0xf]
    %v1216 = vunpack.c.l.bf16 %v1214
    %v1217 = vunpack.c.h.bf16 %v1214
    %v1218 = vunpack.c.l.bf16 %v1215
    %1222 = vrot.lane.b32.xlu0 %v1216, 91
    %v1223 = vpop.permute.xlu0 %1222
    %1224 = vrot.lane.b32.xlu0 %v1217, 91
    %v1225 = vpop.permute.xlu0 %1224
    %1226 = vrot.lane.b32.xlu0 %v1218, 91
    %v1227 = vpop.permute.xlu0 %1226
    %v1228 = vsel %vm238, %v1223, %v1225
    %v1229 = vsel %vm238, %v1225, %v1227
    %1233 = vst [vmem:[#allocation4 + $0xa8] sm:$0xff] %v1228
    %1234 = vst [vmem:[#allocation4 + $0xb0] sm:$0xff] %v1229
    %1235 = vst.msk [vmem:[#allocation4 + $0xb8] sm:$0xff] %vm432, %v1227
    %v1236 = vld [vmem:[#allocation2] sm:$0xff]
    %v1237 = vld [vmem:[#allocation2 + $0x8] sm:$0xf]
    %v1238 = vunpack.c.l.bf16 %v1236
    %v1239 = vunpack.c.h.bf16 %v1236
    %v1240 = vunpack.c.l.bf16 %v1237
    %1244 = vrot.lane.b32.xlu0 %v1238, 90
    %v1245 = vpop.permute.xlu0 %1244
    %1246 = vrot.lane.b32.xlu0 %v1239, 90
    %v1247 = vpop.permute.xlu0 %1246
    %1248 = vrot.lane.b32.xlu0 %v1240, 90
    %v1249 = vpop.permute.xlu0 %1248
    %v1250 = vsel %vm259, %v1245, %v1247
    %v1251 = vsel %vm259, %v1247, %v1249
    %1255 = vst [vmem:[#allocation4 + $0xc0] sm:$0xff] %v1250
    %1256 = vst [vmem:[#allocation4 + $0xc8] sm:$0xff] %v1251
    %1257 = vst.msk [vmem:[#allocation4 + $0xd0] sm:$0xff] %vm432, %v1249
    %v1258 = vld [vmem:[#allocation4] sm:$0xff]
    %v1259 = vld [vmem:[#allocation4 + $0x8] sm:$0xff]
    %v1260 = vld [vmem:[#allocation4 + $0x10] sm:$0xff]
    %v1261 = vld [vmem:[#allocation4 + $0x18] sm:$0xff]
    %v1262 = vld [vmem:[#allocation4 + $0x20] sm:$0xff]
    %v1263 = vld [vmem:[#allocation4 + $0x28] sm:$0xff]
    %v1264 = vld [vmem:[#allocation4 + $0x30] sm:$0xff]
    %v1265 = vld [vmem:[#allocation4 + $0x38] sm:$0xff]
    %v1266 = vld [vmem:[#allocation4 + $0x40] sm:$0xff]
    %v1267 = vld [vmem:[#allocation4 + $0x48] sm:$0xff]
    %v1268 = vld [vmem:[#allocation4 + $0x50] sm:$0xff]
    %v1269 = vld [vmem:[#allocation4 + $0x58] sm:$0xff]
    %v1270 = vld [vmem:[#allocation4 + $0x60] sm:$0xff]
    %v1271 = vld [vmem:[#allocation4 + $0x68] sm:$0xff]
    %v1272 = vld [vmem:[#allocation4 + $0x70] sm:$0xff]
    %v1273 = vld [vmem:[#allocation4 + $0x78] sm:$0xff]
    %v1274 = vld [vmem:[#allocation4 + $0x80] sm:$0xff]
    %v1275 = vld [vmem:[#allocation4 + $0x88] sm:$0xff]
    %v1276 = vld [vmem:[#allocation4 + $0x90] sm:$0xff]
    %v1277 = vld [vmem:[#allocation4 + $0x98] sm:$0xff]
    %v1278 = vld [vmem:[#allocation4 + $0xa0] sm:$0xff]
    %v1279 = vld [vmem:[#allocation4 + $0xa8] sm:$0xff]
    %v1280 = vld [vmem:[#allocation4 + $0xb0] sm:$0xff]
    %v1281 = vld [vmem:[#allocation4 + $0xb8] sm:$0xff]
    %v1282 = vld [vmem:[#allocation4 + $0xc0] sm:$0xff]
    %v1283 = vld [vmem:[#allocation4 + $0xc8] sm:$0xff]
    %v1284 = vld [vmem:[#allocation4 + $0xd0] sm:$0xff]
    %v1285 = vpack.c.bf16 %v1261, %v1258
    %v1286 = vpack.c.bf16 %v1262, %v1259
    %v1287 = vpack.c.bf16 %v1263, %v1260
    %v1288 = vpack.c.bf16 %v1267, %v1264
    %v1289 = vpack.c.bf16 %v1268, %v1265
    %v1290 = vpack.c.bf16 %v1269, %v1266
    %v1291 = vpack.c.bf16 %v1273, %v1270
    %v1292 = vpack.c.bf16 %v1274, %v1271
    %v1293 = vpack.c.bf16 %v1275, %v1272
    %v1294 = vpack.c.bf16 %v1279, %v1276
    %v1295 = vpack.c.bf16 %v1280, %v1277
    %v1296 = vpack.c.bf16 %v1281, %v1278
    %v1297 = vpack.c.bf16 %v1282, %v1282
    %v1298 = vpack.c.bf16 %v1283, %v1283
    %v1299 = vpack.c.bf16 %v1284, %v1284
    %v1301 = vsel %vm661, %v1297, 0
    %v1304 = vsel %vm661, %v1298, 0
    %v1307 = vsel %vm661, %v1299, 0
    %1309 = vmatprep.subr.bf16.mxu0 0
    %1310 = vmatpush1.bf16.msra.mxu0 0
    %1311 = vmatprep.subr.bf16.mxu0 0
    %1312 = vmatpush1.bf16.msra.mxu0 0
    %1313 = vmatprep.subr.bf16.mxu0 0
    %1314 = vmatpush1.bf16.msra.mxu0 0
    %1315 = vmatprep.subr.bf16.mxu0 %v1304
    %1316 = vmatpush1.bf16.msra.mxu0 %v1301
    %1317 = vmatprep.subr.bf16.mxu0 %v1295
    %1318 = vmatpush1.bf16.msra.mxu0 %v1294
    %1319 = vmatprep.subr.bf16.mxu0 %v1292
    %1320 = vmatpush1.bf16.msra.mxu0 %v1291
    %1321 = vmatprep.subr.bf16.mxu0 %v1289
    %1322 = vmatpush1.bf16.msra.mxu0 %v1288
    %1323 = vmatprep.subr.bf16.mxu0 %v1286
    %1324 = vmatpush1.bf16.msra.mxu0 %v1285
    %1325 = vmatprep.subr.bf16.mxu0 0
    %1326 = vmatpush2.bf16.msra.mxu0 0
    %1327 = vmatprep.subr.bf16.mxu0 0
    %1328 = vmatpush2.bf16.msra.mxu0 0
    %1329 = vmatprep.subr.bf16.mxu0 0
    %1330 = vmatpush2.bf16.msra.mxu0 0
    %1331 = vmatprep.subr.bf16.mxu0 0
    %1332 = vmatpush2.bf16.msra.mxu0 0
    %1333 = vmatprep.subr.bf16.mxu0 0
    %1334 = vmatpush2.bf16.msra.mxu0 0
    %1335 = vmatprep.subr.bf16.mxu0 0
    %1336 = vmatpush2.bf16.msra.mxu0 0
    %1337 = vmatprep.subr.bf16.mxu0 0
    %1338 = vmatpush2.bf16.msra.mxu0 0
    %1339 = vmatprep.subr.bf16.mxu0 0
    %1340 = vmatpush2.bf16.msra.mxu0 0
    %1341 = vmatprep.mubr.bf16.mxu0 0
    %1342 = vmatmul.mubr.bf16.gmra.mxu0 %v659
    %v1343 = vpop.f32.mrf.mxu0
    %v1344 = vadd.f32 %v655, %v1343
    %v1345 = vpop.f32.mrf.mxu0
    %v1346 = vadd.f32 %v655, %v1345
    %v1347 = vpop.f32.mrf.mxu0
    %v1348 = vpop.f32.mrf.mxu0
    %1349 = vdwg.mxu0
    %1350 = vmatprep.subr.bf16.mxu0 0
    %1351 = vmatpush1.bf16.msra.mxu0 0
    %1352 = vmatprep.subr.bf16.mxu0 0
    %1353 = vmatpush1.bf16.msra.mxu0 0
    %1354 = vmatprep.subr.bf16.mxu0 0
    %1355 = vmatpush1.bf16.msra.mxu0 0
    %1356 = vmatprep.subr.bf16.mxu0 0
    %1357 = vmatpush1.bf16.msra.mxu0 %v1307
    %1358 = vmatprep.subr.bf16.mxu0 0
    %1359 = vmatpush1.bf16.msra.mxu0 %v1296
    %1360 = vmatprep.subr.bf16.mxu0 0
    %1361 = vmatpush1.bf16.msra.mxu0 %v1293
    %1362 = vmatprep.subr.bf16.mxu0 0
    %1363 = vmatpush1.bf16.msra.mxu0 %v1290
    %1364 = vmatprep.subr.bf16.mxu0 0
    %1365 = vmatpush1.bf16.msra.mxu0 %v1287
    %1366 = vmatprep.subr.bf16.mxu0 0
    %1367 = vmatpush2.bf16.msra.mxu0 0
    %1368 = vmatprep.subr.bf16.mxu0 0
    %1369 = vmatpush2.bf16.msra.mxu0 0
    %1370 = vmatprep.subr.bf16.mxu0 0
    %1371 = vmatpush2.bf16.msra.mxu0 0
    %1372 = vmatprep.subr.bf16.mxu0 0
    %1373 = vmatpush2.bf16.msra.mxu0 0
    %1374 = vmatprep.subr.bf16.mxu0 0
    %1375 = vmatpush2.bf16.msra.mxu0 0
    %1376 = vmatprep.subr.bf16.mxu0 0
    %1377 = vmatpush2.bf16.msra.mxu0 0
    %1378 = vmatprep.subr.bf16.mxu0 0
    %1379 = vmatpush2.bf16.msra.mxu0 0
    %1380 = vmatprep.subr.bf16.mxu0 0
    %1381 = vmatpush2.bf16.msra.mxu0 0
    %1382 = vmatprep.mubr.bf16.mxu0 0
    %1383 = vmatmul.mubr.bf16.gmra.mxu0 %v659
    %v1384 = vpop.f32.mrf.mxu0
    %v1385 = vadd.f32 %v655, %v1384
    %v1386 = vpop.f32.mrf.mxu0
    %v1387 = vpop.f32.mrf.mxu0
    %v1388 = vpop.f32.mrf.mxu0
    %1389 = vdwg.mxu0
    %v1390 = vmax.f32 %v1344, 0.0
    %v1391 = vmax.f32 %v1346, 0.0
    %v1392 = vmax.f32 %v1385, 0.0
    %s1393 = scalar_lea.vmem [#allocation5], 24
    %1394 = vst [vmem:[%s1393] sm:$0xff] %v1390
    %1395 = vst [vmem:[%s1393 + $0x8] sm:$0xff] %v1391
    %1396 = vst.msk [vmem:[%s1393 + $0x10] sm:$0xff] %vm432, %v1392
    // Predicated region
    $region22: #{tpu_custom_call.1} parent=1 // pred_check
      _
    $region23: #{tpu_custom_call.1} parent=1 // pred_check_branch
      %1398 = sbr.rel (0) target = $region25
    $region24: #{tpu_custom_call.1} parent=1 // pred_region
      %s1400 = ssub.s32 768, 768
      %1401 = vsyncadd [#allocation6], %s1400
      %s1402 = sshll.u32 [#allocation5], 4
      %s1403 = int_to_ptr.vmem [resolvable:$true] %s1402
      %1408 = dma.vmem_to_hbm [thread:$0]  %s1403, 768, %s5, [#allocation6], 384, 384, 24
    $region25: #{tpu_custom_call.1} parent=1 // pred_fallthru
      _
    // Predicated region
    $region26: #{tpu_custom_call.1} parent=1 // pred_check
      _
    $region27: #{tpu_custom_call.1} parent=1 // pred_check_branch
      %1410 = sbr.rel (0) target = $region29
    $region28: #{tpu_custom_call.1} parent=1 // pred_region
      %1411 = dma.done [#allocation6], 768
    $region29: #{tpu_custom_call.1} parent=1 // pred_fallthru
      _
    %1412 = vsyncpa [#allocation6], 1

</llo_original>
